<compile_context>
chip_gen: v5e
topology: v5e:2x2
jax: 0.10.0
libtpu: 0.0.40
codegen_flags: <defaults>
</compile_context>

<pallas_src>
import jax
import jax.numpy as jnp
from jax import lax
from jax.experimental import pallas as pl
from jax.experimental.pallas import tpu as pltpu

EPS = 1e-5
# Above every generation's default scoped-VMEM limit (16/32 MiB) and safely
# below the smallest physical VMEM (64 MiB on v7x).
VMEM_LIMIT = 48 * 1024 * 1024


# ---------------------------------------------------------------------------
# Pallas kernels
# ---------------------------------------------------------------------------
def _bottleneck_kernel(x_ref, s1_ref, b1_ref, w1_ref, s2_ref, b2_ref, t_ref):
    """ReLU(BN1(x)) @ W1 then ReLU(BN2(.)) on one (tm, C_slab) row tile."""
    x = x_ref[...]                                            # (tm, C_slab) f32
    y = jnp.maximum(x * s1_ref[...] + b1_ref[...], 0.0)       # BN1 + ReLU (f32)
    y = y.astype(jnp.bfloat16)                                # MXU-native operand
    t = jnp.dot(y, w1_ref[...], preferred_element_type=jnp.float32)  # 1x1 conv
    t = jnp.maximum(t * s2_ref[...] + b2_ref[...], 0.0)       # BN2 + ReLU (f32)
    t_ref[...] = t.astype(jnp.bfloat16)                       # lane-dense store


def _conv3x3_kernel(tp_ref, w2_ref, o_ref):
    """3x3 'SAME' conv: in-VMEM im2col + one long-K MXU matmul (one image)."""
    # tp_ref: (1, H+2, W+2, Cp) bf16 halo-padded bottleneck output
    # w2_ref: (9*Cp, G) bf16    o_ref: (1, H, W, G) f32
    _, hp, wp, cp = tp_ref.shape
    h, w = hp - 2, wp - 2
    g = o_ref.shape[3]
    tp = tp_ref[...]                                          # (1, H+2, W+2, Cp)
    taps = []
    for dy in range(3):
        for dx in range(3):                                   # tap k = dy*3 + dx
            taps.append(tp[0, dy:dy + h, dx:dx + w, :].reshape(h * w, cp))
    tmat = jnp.concatenate(taps, axis=-1)                     # (H*W, 9*Cp) in VMEM
    out = jnp.dot(tmat, w2_ref[...], preferred_element_type=jnp.float32)
    o_ref[...] = out.reshape(1, h, w, g)


# ---------------------------------------------------------------------------
# pallas_call wrappers
# ---------------------------------------------------------------------------
def _round_up(v, m):
    return ((v + m - 1) // m) * m


def _choose_tm(m, target=512):
    tm = min(target, m)
    tm = max(8, (tm // 8) * 8)
    # keep >= 2 grid steps so v7x's two TensorCores both get work
    while tm > 8 and pl.cdiv(m, tm) < 2:
        tm = max(8, ((tm // 2) // 8) * 8)
    return tm


def fused_bottleneck(x2d, s1, b1, w1, s2, b2):
    m, c_slab = x2d.shape
    cmid_p = w1.shape[1]
    tm = _choose_tm(m)
    grid_m = pl.cdiv(m, tm)
    m_pad = grid_m * tm
    x_in = x2d if m_pad == m else jnp.pad(x2d, ((0, m_pad - m), (0, 0)))
    out = pl.pallas_call(
        _bottleneck_kernel,
        out_shape=jax.ShapeDtypeStruct((m_pad, cmid_p), jnp.bfloat16),
        grid=(grid_m,),
        in_specs=[
            pl.BlockSpec((tm, c_slab), lambda i: (i, 0)),
            pl.BlockSpec((1, c_slab), lambda i: (0, 0)),
            pl.BlockSpec((1, c_slab), lambda i: (0, 0)),
            pl.BlockSpec((c_slab, cmid_p), lambda i: (0, 0)),
            pl.BlockSpec((1, cmid_p), lambda i: (0, 0)),
            pl.BlockSpec((1, cmid_p), lambda i: (0, 0)),
        ],
        out_specs=pl.BlockSpec((tm, cmid_p), lambda i: (i, 0)),
        compiler_params=pltpu.CompilerParams(
            dimension_semantics=("parallel",),
            vmem_limit_bytes=VMEM_LIMIT),
    )(x_in, s1, b1, w1, s2, b2)
    return out if m_pad == m else out[:m]


def conv3x3(t_pad, w2r, g):
    n, hp, wp, cp = t_pad.shape
    h, w = hp - 2, wp - 2
    return pl.pallas_call(
        _conv3x3_kernel,
        out_shape=jax.ShapeDtypeStruct((n, h, w, g), jnp.float32),
        grid=(n,),
        in_specs=[
            pl.BlockSpec((1, hp, wp, cp), lambda i: (i, 0, 0, 0)),
            pl.BlockSpec((9 * cp, g), lambda i: (0, 0)),
        ],
        out_specs=pl.BlockSpec((1, h, w, g), lambda i: (i, 0, 0, 0)),
        compiler_params=pltpu.CompilerParams(
            dimension_semantics=("parallel",),
            vmem_limit_bytes=VMEM_LIMIT),
    )(t_pad, w2r)


# ---------------------------------------------------------------------------
# Glue: BN folding, slab management, layer loop
# ---------------------------------------------------------------------------
def fold_bn(gamma, beta, mean, var):
    scale = gamma * lax.rsqrt(var + EPS)
    shift = beta - mean * scale
    return scale.reshape(1, -1), shift.reshape(1, -1)


def dense_block_forward(x_nchw, params):
    x = jnp.transpose(x_nchw, (0, 2, 3, 1)).astype(jnp.float32)  # NCHW -> NHWC
    n, h, w, c0 = x.shape
    layers = params["layers"]
    g = layers[0]["w2"].shape[-1]
    cmid = layers[0]["w1"].shape[-1]
    cmid_p = _round_up(cmid, 128)            # lane-dense intermediate width
    c_total = c0 + len(layers) * g
    m = n * h * w

    # Preallocated feature slab; growth channels are written in place each
    # layer (no per-layer concatenate of the whole, growing feature map).
    slab = jnp.pad(x.reshape(m, c0), ((0, 0), (0, c_total - c0)))

    for li, lp in enumerate(layers):
        c_in = c0 + li * g
        s1, b1 = fold_bn(*lp["bn1"])         # (1, c_in)
        s2, b2 = fold_bn(*lp["bn2"])         # (1, cmid)
        # Zero-pad BN1 / W1 to the fixed slab width: not-yet-written channels
        # are zero in the slab AND get zero scale/weight -> no contribution.
        s1p = jnp.zeros((1, c_total), jnp.float32).at[:, :c_in].set(s1)
        b1p = jnp.zeros((1, c_total), jnp.float32).at[:, :c_in].set(b1)
        w1p = (jnp.zeros((c_total, cmid_p), jnp.bfloat16)
               .at[:c_in, :cmid].set(lp["w1"].astype(jnp.bfloat16)))
        s2p = jnp.zeros((1, cmid_p), jnp.float32).at[:, :cmid].set(s2)
        b2p = jnp.zeros((1, cmid_p), jnp.float32).at[:, :cmid].set(b2)
        w2p = (jnp.zeros((9, cmid_p, g), jnp.bfloat16)
               .at[:, :cmid, :].set(lp["w2"].astype(jnp.bfloat16)))
        w2r = w2p.reshape(9 * cmid_p, g)     # row k*cmid_p + c matches tap order

        t2d = fused_bottleneck(slab, s1p, b1p, w1p, s2p, b2p)   # (m, cmid_p) bf16
        t = t2d.reshape(n, h, w, cmid_p)
        t_pad = jnp.pad(t, ((0, 0), (1, 1), (1, 1), (0, 0)))    # 3x3 halo
        new = conv3x3(t_pad, w2r, g)                            # (n,h,w,g) f32
        slab = slab.at[:, c_in:c_in + g].set(new.reshape(m, g))  # in-place DUS

    out = slab.reshape(n, h, w, c_total)
    return jnp.transpose(out, (0, 3, 1, 2))                     # back to NCHW


def reference_forward(x_nchw, params):
    # Independent pure-JAX reference with the same bf16 quantization points
    # (bf16 matmul/conv operands, f32 accumulation) for a tight comparison.
    x = jnp.transpose(x_nchw, (0, 2, 3, 1)).astype(jnp.float32)
    feats = x
    for lp in params["layers"]:
        cmid, g = lp["w2"].shape[1], lp["w2"].shape[2]
        s1, b1 = fold_bn(*lp["bn1"])
        s2, b2 = fold_bn(*lp["bn2"])
        y1 = jnp.maximum(feats * s1 + b1, 0.0).astype(jnp.bfloat16)
        t = jnp.einsum("nhwc,cd->nhwd", y1, lp["w1"].astype(jnp.bfloat16),
                       preferred_element_type=jnp.float32)
        y2 = jnp.maximum(t * s2 + b2, 0.0).astype(jnp.bfloat16)
        w_hwio = lp["w2"].astype(jnp.bfloat16).reshape(3, 3, cmid, g)
        new = lax.conv_general_dilated(
            y2, w_hwio, (1, 1), "SAME",
            dimension_numbers=("NHWC", "HWIO", "NHWC"),
            preferred_element_type=jnp.float32)
        feats = jnp.concatenate([feats, new], axis=-1)
    return jnp.transpose(feats, (0, 3, 1, 2))


# ---------------------------------------------------------------------------
# Deterministic parameter init
# ---------------------------------------------------------------------------
def init_params(key, c0, nb_layers, growth_rate):
    cmid = 4 * growth_rate
    layers = []
    for l in range(nb_layers):
        c_in = c0 + l * growth_rate
        keys = jax.random.split(jax.random.fold_in(key, l), 10)
        bn1 = (1.0 + 0.1 * jax.random.normal(keys[0], (c_in,), jnp.float32),
               0.1 * jax.random.normal(keys[1], (c_in,), jnp.float32),
               0.1 * jax.random.normal(keys[2], (c_in,), jnp.float32),
               jax.random.uniform(keys[3], (c_in,), jnp.float32, 0.5, 1.5))
        w1 = 0.1 * jax.random.normal(keys[4], (c_in, cmid), jnp.float32)
        bn2 = (1.0 + 0.1 * jax.random.normal(keys[5], (cmid,), jnp.float32),
               0.1 * jax.random.normal(keys[6], (cmid,), jnp.float32),
               0.1 * jax.random.normal(keys[7], (cmid,), jnp.float32),
               jax.random.uniform(keys[8], (cmid,), jnp.float32, 0.5, 1.5))
        # w2[k] = 3x3 kernel tap (dy, dx), k = dy*3 + dx, shape (cmid, growth)
        w2 = 0.1 * jax.random.normal(keys[9], (9, cmid, growth_rate), jnp.float32)
        layers.append({"bn1": bn1, "w1": w1, "bn2": bn2, "w2": w2})
    return {"layers": layers}


# ---------------------------------------------------------------------------
if __name__ == "__main__":
    N, C0, H, W = 2, 4, 16, 16
    nb_layers, growth_rate = 3, 4

    x = jax.random.normal(jax.random.PRNGKey(0), (N, C0, H, W), jnp.float32)
    params = init_params(jax.random.PRNGKey(1), C0, nb_layers, growth_rate)

    fwd = jax.jit(lambda inp: dense_block_forward(inp, params))
    out = jax.block_until_ready(fwd(x))

    assert out.shape == (N, C0 + nb_layers * growth_rate, H, W), out.shape

    ref = reference_forward(x, params)
    err = float(jnp.max(jnp.abs(out - ref)))
    assert err < 2e-2, f"max abs err {err}"

    print("KERNEL_OK")
</pallas_src>

<mosaic_0001>
module attributes {stable_mosaic.version = 11 : i64} {
  func.func @_bottleneck_kernel(%arg0: i32, %arg1: memref<256x16xf32, #tpu.memory_space<vmem>>, %arg2: memref<1x16xf32, #tpu.memory_space<vmem>>, %arg3: memref<1x16xf32, #tpu.memory_space<vmem>>, %arg4: memref<16x128xbf16, #tpu.memory_space<vmem>>, %arg5: memref<1x128xf32, #tpu.memory_space<vmem>>, %arg6: memref<1x128xf32, #tpu.memory_space<vmem>>, %arg7: memref<256x128xbf16, #tpu.memory_space<vmem>>) attributes {dimension_semantics = [#tpu.dimension_semantics<parallel>], iteration_bounds = array<i64: 2>, scalar_prefetch = 0 : i64, scratch_operands = 0 : i64, tpu.core_type = #tpu.core_type<tc>, window_params = [{transform_indices = @transform_0, window_bounds = array<i64: 256, 16>}, {pipeline_mode = #tpu.pipeline_mode<synchronous>, transform_indices = @transform_1, window_bounds = array<i64: 1, 16>}, {pipeline_mode = #tpu.pipeline_mode<synchronous>, transform_indices = @transform_2, window_bounds = array<i64: 1, 16>}, {pipeline_mode = #tpu.pipeline_mode<synchronous>, transform_indices = @transform_3, window_bounds = array<i64: 16, 128>}, {pipeline_mode = #tpu.pipeline_mode<synchronous>, transform_indices = @transform_4, window_bounds = array<i64: 1, 128>}, {pipeline_mode = #tpu.pipeline_mode<synchronous>, transform_indices = @transform_5, window_bounds = array<i64: 1, 128>}, {transform_indices = @transform_6, window_bounds = array<i64: 256, 128>}]} {
    %c0 = arith.constant 0 : index
    %c0_0 = arith.constant 0 : index
    %0 = vector.load %arg1[%c0, %c0_0] : memref<256x16xf32, #tpu.memory_space<vmem>>, vector<256x16xf32>
    %c0_1 = arith.constant 0 : index
    %c0_2 = arith.constant 0 : index
    %1 = vector.load %arg2[%c0_1, %c0_2] : memref<1x16xf32, #tpu.memory_space<vmem>>, vector<1x16xf32>
    %2 = vector.broadcast %1 : vector<1x16xf32> to vector<256x16xf32>
    %3 = arith.mulf %0, %2 : vector<256x16xf32>
    %c0_3 = arith.constant 0 : index
    %c0_4 = arith.constant 0 : index
    %4 = vector.load %arg3[%c0_3, %c0_4] : memref<1x16xf32, #tpu.memory_space<vmem>>, vector<1x16xf32>
    %5 = vector.broadcast %4 : vector<1x16xf32> to vector<256x16xf32>
    %6 = arith.addf %3, %5 : vector<256x16xf32>
    %cst = arith.constant 0.000000e+00 : f32
    %7 = vector.broadcast %cst : f32 to vector<256x16xf32>
    %8 = arith.maximumf %6, %7 : vector<256x16xf32>
    %9 = arith.truncf %8 : vector<256x16xf32> to vector<256x16xbf16>
    %c0_5 = arith.constant 0 : index
    %c0_6 = arith.constant 0 : index
    %10 = vector.load %arg4[%c0_5, %c0_6] : memref<16x128xbf16, #tpu.memory_space<vmem>>, vector<16x128xbf16>
    %cst_7 = arith.constant dense<0.000000e+00> : vector<256x128xf32>
    %11 = tpu.matmul %9, %10, %cst_7 {dimension_numbers = #tpu.dot_dimension_numbers<[1], [0], [0], [1], [0, 0, 1, 1], [], []>} : vector<256x16xbf16>, vector<16x128xbf16>, vector<256x128xf32> -> vector<256x128xf32>
    %c0_8 = arith.constant 0 : index
    %c0_9 = arith.constant 0 : index
    %12 = vector.load %arg5[%c0_8, %c0_9] : memref<1x128xf32, #tpu.memory_space<vmem>>, vector<1x128xf32>
    %13 = vector.broadcast %12 : vector<1x128xf32> to vector<256x128xf32>
    %14 = arith.mulf %11, %13 : vector<256x128xf32>
    %c0_10 = arith.constant 0 : index
    %c0_11 = arith.constant 0 : index
    %15 = vector.load %arg6[%c0_10, %c0_11] : memref<1x128xf32, #tpu.memory_space<vmem>>, vector<1x128xf32>
    %16 = vector.broadcast %15 : vector<1x128xf32> to vector<256x128xf32>
    %17 = arith.addf %14, %16 : vector<256x128xf32>
    %cst_12 = arith.constant 0.000000e+00 : f32
    %18 = vector.broadcast %cst_12 : f32 to vector<256x128xf32>
    %19 = arith.maximumf %17, %18 : vector<256x128xf32>
    %20 = arith.truncf %19 : vector<256x128xf32> to vector<256x128xbf16>
    %c0_13 = arith.constant 0 : index
    %c0_14 = arith.constant 0 : index
    %21 = vector.load %arg7[%c0_13, %c0_14] : memref<256x128xbf16, #tpu.memory_space<vmem>>, vector<256x128xbf16>
    tpu.vector_store %arg7[%c0_13, %c0_14], %20 {strides = array<i32>} : memref<256x128xbf16, #tpu.memory_space<vmem>>, vector<256x128xbf16>,
    return
  }
  func.func @transform_0(%arg0: i32) -> (i32, i32) {
    %c0_i32 = arith.constant 0 : i32
    %c0_i32_0 = arith.constant 0 : i32
    return %arg0, %c0_i32 : i32, i32
  }
  func.func @transform_1(%arg0: i32) -> (i32, i32) {
    %c0_i32 = arith.constant 0 : i32
    %c0_i32_0 = arith.constant 0 : i32
    %c0_i32_1 = arith.constant 0 : i32
    return %c0_i32, %c0_i32_0 : i32, i32
  }
  func.func @transform_2(%arg0: i32) -> (i32, i32) {
    %c0_i32 = arith.constant 0 : i32
    %c0_i32_0 = arith.constant 0 : i32
    %c0_i32_1 = arith.constant 0 : i32
    return %c0_i32, %c0_i32_0 : i32, i32
  }
  func.func @transform_3(%arg0: i32) -> (i32, i32) {
    %c0_i32 = arith.constant 0 : i32
    %c0_i32_0 = arith.constant 0 : i32
    %c0_i32_1 = arith.constant 0 : i32
    return %c0_i32, %c0_i32_0 : i32, i32
  }
  func.func @transform_4(%arg0: i32) -> (i32, i32) {
    %c0_i32 = arith.constant 0 : i32
    %c0_i32_0 = arith.constant 0 : i32
    %c0_i32_1 = arith.constant 0 : i32
    return %c0_i32, %c0_i32_0 : i32, i32
  }
  func.func @transform_5(%arg0: i32) -> (i32, i32) {
    %c0_i32 = arith.constant 0 : i32
    %c0_i32_0 = arith.constant 0 : i32
    %c0_i32_1 = arith.constant 0 : i32
    return %c0_i32, %c0_i32_0 : i32, i32
  }
  func.func @transform_6(%arg0: i32) -> (i32, i32) {
    %c0_i32 = arith.constant 0 : i32
    %c0_i32_0 = arith.constant 0 : i32
    return %arg0, %c0_i32 : i32, i32
  }
}

module attributes {stable_mosaic.version = 11 : i64} {
  func.func @_conv3x3_kernel(%arg0: i32, %arg1: memref<1x18x18x128xbf16, #tpu.memory_space<vmem>>, %arg2: memref<1152x4xbf16, #tpu.memory_space<vmem>>, %arg3: memref<1x16x16x4xf32, #tpu.memory_space<vmem>>) attributes {dimension_semantics = [#tpu.dimension_semantics<parallel>], iteration_bounds = array<i64: 2>, scalar_prefetch = 0 : i64, scratch_operands = 0 : i64, tpu.core_type = #tpu.core_type<tc>, window_params = [{transform_indices = @transform_0, window_bounds = array<i64: 1, 18, 18, 128>}, {pipeline_mode = #tpu.pipeline_mode<synchronous>, transform_indices = @transform_1, window_bounds = array<i64: 1152, 4>}, {transform_indices = @transform_2, window_bounds = array<i64: 1, 16, 16, 4>}]} {
    %c0 = arith.constant 0 : index
    %c0_0 = arith.constant 0 : index
    %c0_1 = arith.constant 0 : index
    %c0_2 = arith.constant 0 : index
    %0 = vector.load %arg1[%c0, %c0_0, %c0_1, %c0_2] : memref<1x18x18x128xbf16, #tpu.memory_space<vmem>>, vector<1x18x18x128xbf16>
    %1 = vector.extract_strided_slice %0 {offsets = [0, 0, 0, 0], sizes = [1, 16, 16, 128], strides = [1, 1, 1, 1]} : vector<1x18x18x128xbf16> to vector<1x16x16x128xbf16>
    %2 = vector.shape_cast %1 : vector<1x16x16x128xbf16> to vector<16x16x128xbf16>
    %3 = vector.shape_cast %2 : vector<16x16x128xbf16> to vector<256x128xbf16>
    %4 = vector.extract_strided_slice %0 {offsets = [0, 0, 1, 0], sizes = [1, 16, 16, 128], strides = [1, 1, 1, 1]} : vector<1x18x18x128xbf16> to vector<1x16x16x128xbf16>
    %5 = vector.shape_cast %4 : vector<1x16x16x128xbf16> to vector<16x16x128xbf16>
    %6 = vector.shape_cast %5 : vector<16x16x128xbf16> to vector<256x128xbf16>
    %7 = vector.extract_strided_slice %0 {offsets = [0, 0, 2, 0], sizes = [1, 16, 16, 128], strides = [1, 1, 1, 1]} : vector<1x18x18x128xbf16> to vector<1x16x16x128xbf16>
    %8 = vector.shape_cast %7 : vector<1x16x16x128xbf16> to vector<16x16x128xbf16>
    %9 = vector.shape_cast %8 : vector<16x16x128xbf16> to vector<256x128xbf16>
    %10 = vector.extract_strided_slice %0 {offsets = [0, 1, 0, 0], sizes = [1, 16, 16, 128], strides = [1, 1, 1, 1]} : vector<1x18x18x128xbf16> to vector<1x16x16x128xbf16>
    %11 = vector.shape_cast %10 : vector<1x16x16x128xbf16> to vector<16x16x128xbf16>
    %12 = vector.shape_cast %11 : vector<16x16x128xbf16> to vector<256x128xbf16>
    %13 = vector.extract_strided_slice %0 {offsets = [0, 1, 1, 0], sizes = [1, 16, 16, 128], strides = [1, 1, 1, 1]} : vector<1x18x18x128xbf16> to vector<1x16x16x128xbf16>
    %14 = vector.shape_cast %13 : vector<1x16x16x128xbf16> to vector<16x16x128xbf16>
    %15 = vector.shape_cast %14 : vector<16x16x128xbf16> to vector<256x128xbf16>
    %16 = vector.extract_strided_slice %0 {offsets = [0, 1, 2, 0], sizes = [1, 16, 16, 128], strides = [1, 1, 1, 1]} : vector<1x18x18x128xbf16> to vector<1x16x16x128xbf16>
    %17 = vector.shape_cast %16 : vector<1x16x16x128xbf16> to vector<16x16x128xbf16>
    %18 = vector.shape_cast %17 : vector<16x16x128xbf16> to vector<256x128xbf16>
    %19 = vector.extract_strided_slice %0 {offsets = [0, 2, 0, 0], sizes = [1, 16, 16, 128], strides = [1, 1, 1, 1]} : vector<1x18x18x128xbf16> to vector<1x16x16x128xbf16>
    %20 = vector.shape_cast %19 : vector<1x16x16x128xbf16> to vector<16x16x128xbf16>
    %21 = vector.shape_cast %20 : vector<16x16x128xbf16> to vector<256x128xbf16>
    %22 = vector.extract_strided_slice %0 {offsets = [0, 2, 1, 0], sizes = [1, 16, 16, 128], strides = [1, 1, 1, 1]} : vector<1x18x18x128xbf16> to vector<1x16x16x128xbf16>
    %23 = vector.shape_cast %22 : vector<1x16x16x128xbf16> to vector<16x16x128xbf16>
    %24 = vector.shape_cast %23 : vector<16x16x128xbf16> to vector<256x128xbf16>
    %25 = vector.extract_strided_slice %0 {offsets = [0, 2, 2, 0], sizes = [1, 16, 16, 128], strides = [1, 1, 1, 1]} : vector<1x18x18x128xbf16> to vector<1x16x16x128xbf16>
    %26 = vector.shape_cast %25 : vector<1x16x16x128xbf16> to vector<16x16x128xbf16>
    %27 = vector.shape_cast %26 : vector<16x16x128xbf16> to vector<256x128xbf16>
    %28 = tpu.concatenate %3, %6, %9, %12, %15, %18, %21, %24, %27 in 1 : vector<256x128xbf16>, vector<256x128xbf16>, vector<256x128xbf16>, vector<256x128xbf16>, vector<256x128xbf16>, vector<256x128xbf16>, vector<256x128xbf16>, vector<256x128xbf16>, vector<256x128xbf16> -> vector<256x1152xbf16>
    %c0_3 = arith.constant 0 : index
    %c0_4 = arith.constant 0 : index
    %29 = vector.load %arg2[%c0_3, %c0_4] : memref<1152x4xbf16, #tpu.memory_space<vmem>>, vector<1152x4xbf16>
    %cst = arith.constant dense<0.000000e+00> : vector<256x4xf32>
    %30 = tpu.matmul %28, %29, %cst {dimension_numbers = #tpu.dot_dimension_numbers<[1], [0], [0], [1], [0, 0, 1, 1], [], []>} : vector<256x1152xbf16>, vector<1152x4xbf16>, vector<256x4xf32> -> vector<256x4xf32>
    %31 = vector.shape_cast %30 : vector<256x4xf32> to vector<1x16x16x4xf32>
    %c0_5 = arith.constant 0 : index
    %c0_6 = arith.constant 0 : index
    %c0_7 = arith.constant 0 : index
    %c0_8 = arith.constant 0 : index
    %32 = vector.load %arg3[%c0_5, %c0_6, %c0_7, %c0_8] : memref<1x16x16x4xf32, #tpu.memory_space<vmem>>, vector<1x16x16x4xf32>
    tpu.vector_store %arg3[%c0_5, %c0_6, %c0_7, %c0_8], %31 {strides = array<i32>} : memref<1x16x16x4xf32, #tpu.memory_space<vmem>>, vector<1x16x16x4xf32>,
    return
  }
  func.func @transform_0(%arg0: i32) -> (i32, i32, i32, i32) {
    %c0_i32 = arith.constant 0 : i32
    %c0_i32_0 = arith.constant 0 : i32
    %c0_i32_1 = arith.constant 0 : i32
    %c0_i32_2 = arith.constant 0 : i32
    return %arg0, %c0_i32, %c0_i32_0, %c0_i32_1 : i32, i32, i32, i32
  }
  func.func @transform_1(%arg0: i32) -> (i32, i32) {
    %c0_i32 = arith.constant 0 : i32
    %c0_i32_0 = arith.constant 0 : i32
    %c0_i32_1 = arith.constant 0 : i32
    return %c0_i32, %c0_i32_0 : i32, i32
  }
  func.func @transform_2(%arg0: i32) -> (i32, i32, i32, i32) {
    %c0_i32 = arith.constant 0 : i32
    %c0_i32_0 = arith.constant 0 : i32
    %c0_i32_1 = arith.constant 0 : i32
    %c0_i32_2 = arith.constant 0 : i32
    return %arg0, %c0_i32, %c0_i32_0, %c0_i32_1 : i32, i32, i32, i32
  }
}

</mosaic_0001>

<llo_original>
// kernel: _lambda_.6
$region0: #{_lambda_.6}
  #allocation0 [shape = 'u32[]', space=smem, size = 0x4, offset = 0x4, fixed_abs, tag = 'smem constant byte address 0x4 - core index']
  #allocation1 [shape = 'u32[72,128]{1,0:T(1,128)}', space=vmem, size = 0x9000, scoped, tag = 'internal scratch']
  %s0 = inlined_call_operand.vmem [shape: f32[512,16], index: 0, kind: input, shape index: {}]
  %s1 = inlined_call_operand.vmem [shape: f32[1,16], index: 1, kind: input, shape index: {}]
  %s2 = inlined_call_operand.vmem [shape: f32[1,16], index: 2, kind: input, shape index: {}]
  %s3 = inlined_call_operand.vmem [shape: bf16[16,128], index: 3, kind: input, shape index: {}]
  %s4 = inlined_call_operand.vmem [shape: f32[1,128], index: 4, kind: input, shape index: {}]
  %s5 = inlined_call_operand.vmem [shape: f32[1,128], index: 5, kind: input, shape index: {}]
  %s6 = inlined_call_operand.vmem [shape: bf16[512,128], index: 6, kind: output, shape index: {}]
  %s7 = sld [smem:[#allocation0]]
  $region57: #{_lambda_.6} parent=0
    _
  %s9 = ssub.s32 1, %s7
  %s10 = scalar_select 0, %s9, %s7
  loop: start=0, step=1, limit=4
  $region2: #{_lambda_.6} parent=0 // loop_pre_header
    _
  $region3: #{_lambda_.6} parent=0 // loop_header
    %s12 = sphi 0, %s16
    %p13 = scmp.ge.s32.totalorder %s12, 4
    %s22 = sphi 0, %s24
    %s25 = sphi 0, %s22
    %s26 = sphi 0, %s25
    %s42 = sphi 0, %s26
    %s46 = sphi 0, %s46
    %s48 = sphi 0, %s46
    %s49 = sphi 0, %s48
    %s63 = sphi 0, %s49
    %s67 = sphi 0, %s67
    %s69 = sphi 0, %s67
    %s70 = sphi 0, %s69
    %s84 = sphi 0, %s70
    %s88 = sphi 0, %s88
    %s90 = sphi 0, %s88
    %s91 = sphi 0, %s90
    %s105 = sphi 0, %s91
    %s109 = sphi 0, %s109
    %s111 = sphi 0, %s109
    %s112 = sphi 0, %s111
    %s126 = sphi 0, %s112
    %s130 = sphi 0, %s130
    %s132 = sphi 0, %s130
    %s133 = sphi 0, %s132
    %s147 = sphi 0, %s133
    %s153 = sphi 0, %s155
    %s156 = sphi 0, %s153
    %s157 = sphi 0, %s156
    %s173 = sphi 0, %s157
  $region4: #{_lambda_.6} parent=0 // loop_header_branch
    %15 = sbr.rel (%p13) target = $region8
  $region5: #{_lambda_.6} parent=0 // loop_body
    %s17 = ssub.s32 %s12, 1
    %s18 = ssub.s32 %s12, 2
    %s19 = sadd.s32 %s12, 1
    %s20 = ssub.s32 %s12, %s19
    %p21 = scmp.eq.s32.totalorder %s20, 0
    %s23 = sadd.s32 %s22, 1
    %s24 = scalar_select %p21, %s22, %s23
    %p27 = pneg %p21
    %p28 = scmp.eq.s32.totalorder %s12, 1
    %p29 = por %p27, %p28
    %p30 = scmp.ne.s32.totalorder %s22, %s25
    %p31 = scmp.eq.s32.totalorder %s12, 0
    %p32 = por %p30, %p31
    %p33 = scmp.ne.s32.totalorder %s22, %s25
    %p34 = scmp.eq.s32.totalorder %s17, 1
    %p35 = por %p33, %p34
    %p36 = scmp.ne.s32.totalorder %s25, %s26
    %p37 = scmp.eq.s32.totalorder %s17, 0
    %p38 = por %p36, %p37
    %p39 = scmp.ne.s32.totalorder %s25, %s26
    %p40 = scmp.eq.s32.totalorder %s18, 1
    %p41 = por %p39, %p40
    %p43 = scmp.ne.s32.totalorder %s26, %s42
    %p44 = scmp.eq.s32.totalorder %s18, 0
    %p45 = por %p43, %p44
    %s47 = sadd.s32 %s46, 1
    %p50 = scmp.eq.s32.totalorder %s12, 1
    %p51 = scmp.ne.s32.totalorder %s46, %s48
    %p52 = scmp.eq.s32.totalorder %s12, 0
    %p53 = por %p51, %p52
    %p54 = scmp.ne.s32.totalorder %s46, %s48
    %p55 = scmp.eq.s32.totalorder %s17, 1
    %p56 = por %p54, %p55
    %p57 = scmp.ne.s32.totalorder %s48, %s49
    %p58 = scmp.eq.s32.totalorder %s17, 0
    %p59 = por %p57, %p58
    %p60 = scmp.ne.s32.totalorder %s48, %s49
    %p61 = scmp.eq.s32.totalorder %s18, 1
    %p62 = por %p60, %p61
    %p64 = scmp.ne.s32.totalorder %s49, %s63
    %p65 = scmp.eq.s32.totalorder %s18, 0
    %p66 = por %p64, %p65
    %s68 = sadd.s32 %s67, 1
    %p71 = scmp.eq.s32.totalorder %s12, 1
    %p72 = scmp.ne.s32.totalorder %s67, %s69
    %p73 = scmp.eq.s32.totalorder %s12, 0
    %p74 = por %p72, %p73
    %p75 = scmp.ne.s32.totalorder %s67, %s69
    %p76 = scmp.eq.s32.totalorder %s17, 1
    %p77 = por %p75, %p76
    %p78 = scmp.ne.s32.totalorder %s69, %s70
    %p79 = scmp.eq.s32.totalorder %s17, 0
    %p80 = por %p78, %p79
    %p81 = scmp.ne.s32.totalorder %s69, %s70
    %p82 = scmp.eq.s32.totalorder %s18, 1
    %p83 = por %p81, %p82
    %p85 = scmp.ne.s32.totalorder %s70, %s84
    %p86 = scmp.eq.s32.totalorder %s18, 0
    %p87 = por %p85, %p86
    %s89 = sadd.s32 %s88, 1
    %p92 = scmp.eq.s32.totalorder %s12, 1
    %p93 = scmp.ne.s32.totalorder %s88, %s90
    %p94 = scmp.eq.s32.totalorder %s12, 0
    %p95 = por %p93, %p94
    %p96 = scmp.ne.s32.totalorder %s88, %s90
    %p97 = scmp.eq.s32.totalorder %s17, 1
    %p98 = por %p96, %p97
    %p99 = scmp.ne.s32.totalorder %s90, %s91
    %p100 = scmp.eq.s32.totalorder %s17, 0
    %p101 = por %p99, %p100
    %p102 = scmp.ne.s32.totalorder %s90, %s91
    %p103 = scmp.eq.s32.totalorder %s18, 1
    %p104 = por %p102, %p103
    %p106 = scmp.ne.s32.totalorder %s91, %s105
    %p107 = scmp.eq.s32.totalorder %s18, 0
    %p108 = por %p106, %p107
    %s110 = sadd.s32 %s109, 1
    %p113 = scmp.eq.s32.totalorder %s12, 1
    %p114 = scmp.ne.s32.totalorder %s109, %s111
    %p115 = scmp.eq.s32.totalorder %s12, 0
    %p116 = por %p114, %p115
    %p117 = scmp.ne.s32.totalorder %s109, %s111
    %p118 = scmp.eq.s32.totalorder %s17, 1
    %p119 = por %p117, %p118
    %p120 = scmp.ne.s32.totalorder %s111, %s112
    %p121 = scmp.eq.s32.totalorder %s17, 0
    %p122 = por %p120, %p121
    %p123 = scmp.ne.s32.totalorder %s111, %s112
    %p124 = scmp.eq.s32.totalorder %s18, 1
    %p125 = por %p123, %p124
    %p127 = scmp.ne.s32.totalorder %s112, %s126
    %p128 = scmp.eq.s32.totalorder %s18, 0
    %p129 = por %p127, %p128
    %s131 = sadd.s32 %s130, 1
    %p134 = scmp.eq.s32.totalorder %s12, 1
    %p135 = scmp.ne.s32.totalorder %s130, %s132
    %p136 = scmp.eq.s32.totalorder %s12, 0
    %p137 = por %p135, %p136
    %p138 = scmp.ne.s32.totalorder %s130, %s132
    %p139 = scmp.eq.s32.totalorder %s17, 1
    %p140 = por %p138, %p139
    %p141 = scmp.ne.s32.totalorder %s132, %s133
    %p142 = scmp.eq.s32.totalorder %s17, 0
    %p143 = por %p141, %p142
    %p144 = scmp.ne.s32.totalorder %s132, %s133
    %p145 = scmp.eq.s32.totalorder %s18, 1
    %p146 = por %p144, %p145
    %p148 = scmp.ne.s32.totalorder %s133, %s147
    %p149 = scmp.eq.s32.totalorder %s18, 0
    %p150 = por %p148, %p149
    %s151 = ssub.s32 %s12, %s19
    %p152 = scmp.eq.s32.totalorder %s151, 0
    %s154 = sadd.s32 %s153, 1
    %s155 = scalar_select %p152, %s153, %s154
    %p158 = pneg %p152
    %p159 = scmp.eq.s32.totalorder %s12, 1
    %p160 = por %p158, %p159
    %p161 = scmp.ne.s32.totalorder %s153, %s156
    %p162 = scmp.eq.s32.totalorder %s12, 0
    %p163 = por %p161, %p162
    %p164 = scmp.ne.s32.totalorder %s153, %s156
    %p165 = scmp.eq.s32.totalorder %s17, 1
    %p166 = por %p164, %p165
    %p167 = scmp.ne.s32.totalorder %s156, %s157
    %p168 = scmp.eq.s32.totalorder %s17, 0
    %p169 = por %p167, %p168
    %p170 = scmp.ne.s32.totalorder %s156, %s157
    %p171 = scmp.eq.s32.totalorder %s18, 1
    %p172 = por %p170, %p171
    %p174 = scmp.ne.s32.totalorder %s157, %s173
    %p175 = scmp.eq.s32.totalorder %s18, 0
    %p176 = por %p174, %p175
    %p177 = scmp.le.s32.totalorder 1, %s12
    %p178 = scmp.lt.s32.totalorder %s12, 3
    %p179 = pnand %p177, %p178
    %p180 = pneg %p179
    // Predicated region
    $region9: #{_lambda_.6} parent=5 // pred_check
      _
    $region10: #{_lambda_.6} parent=5 // pred_check_branch
      %182 = sbr.rel (%p179) target = $region12
    $region11: #{_lambda_.6} parent=5 // pred_region
      %s183 = ssub.s32 %s12, 1
      // Predicated region
      $region13: #{_lambda_.6} parent=11 // pred_check
        %p184 = pneg %p59
      $region14: #{_lambda_.6} parent=11 // pred_check_branch
        %186 = sbr.rel (%p184) target = $region16
      $region15: #{_lambda_.6} parent=11 // pred_region
        _
      $region16: #{_lambda_.6} parent=11 // pred_fallthru
        _
      // Predicated region
      $region17: #{_lambda_.6} parent=11 // pred_check
        %p187 = pneg %p80
      $region18: #{_lambda_.6} parent=11 // pred_check_branch
        %189 = sbr.rel (%p187) target = $region20
      $region19: #{_lambda_.6} parent=11 // pred_region
        _
      $region20: #{_lambda_.6} parent=11 // pred_fallthru
        _
      // Predicated region
      $region21: #{_lambda_.6} parent=11 // pred_check
        %p190 = pneg %p101
      $region22: #{_lambda_.6} parent=11 // pred_check_branch
        %192 = sbr.rel (%p190) target = $region24
      $region23: #{_lambda_.6} parent=11 // pred_region
        _
      $region24: #{_lambda_.6} parent=11 // pred_fallthru
        _
      // Predicated region
      $region25: #{_lambda_.6} parent=11 // pred_check
        %p193 = pneg %p122
      $region26: #{_lambda_.6} parent=11 // pred_check_branch
        %195 = sbr.rel (%p193) target = $region28
      $region27: #{_lambda_.6} parent=11 // pred_region
        _
      $region28: #{_lambda_.6} parent=11 // pred_fallthru
        _
      // Predicated region
      $region29: #{_lambda_.6} parent=11 // pred_check
        %p196 = pneg %p143
      $region30: #{_lambda_.6} parent=11 // pred_check_branch
        %198 = sbr.rel (%p196) target = $region32
      $region31: #{_lambda_.6} parent=11 // pred_region
        _
      $region32: #{_lambda_.6} parent=11 // pred_fallthru
        _
    $region12: #{_lambda_.6} parent=5 // pred_fallthru
      _
    %p199 = scmp.lt.s32.totalorder %s12, 2
    // Predicated region
    $region33: #{_lambda_.6} parent=5 // pred_check
      %p200 = pneg %p199
    $region34: #{_lambda_.6} parent=5 // pred_check_branch
      %202 = sbr.rel (%p200) target = $region36
    $region35: #{_lambda_.6} parent=5 // pred_region
      // Predicated region
      $region37: #{_lambda_.6} parent=35 // pred_check
        %p203 = pneg %p32
      $region38: #{_lambda_.6} parent=35 // pred_check_branch
        %205 = sbr.rel (%p203) target = $region40
      $region39: #{_lambda_.6} parent=35 // pred_region
        %s206 = smul.u32 32, %s12
        %p207 = scmp.lt.s32.totalorder %s206, 63
        %s208 = scalar_select %p207, %s206, 63
        %s209 = smul.addr %s208, 8
        %s210 = scalar_lea.vmem %s0, %s209
        %s211 = smul.u32 32, %s12
      $region40: #{_lambda_.6} parent=35 // pred_fallthru
        _
    $region36: #{_lambda_.6} parent=5 // pred_fallthru
      _
    %p212 = scmp.le.s32.totalorder 1, %s12
    %p213 = scmp.lt.s32.totalorder %s12, 3
    %p214 = pnand %p212, %p213
    %p215 = pneg %p214
    // Predicated region
    $region41: #{_lambda_.6} parent=5 // pred_check
      _
    $region42: #{_lambda_.6} parent=5 // pred_check_branch
      %217 = sbr.rel (%p214) target = $region44
    $region43: #{_lambda_.6} parent=5 // pred_region
      %s218 = ssub.s32 %s12, 1
      %s219 = smul.u32 32, %s17
      %p220 = scmp.lt.s32.totalorder %s219, 63
      %s221 = scalar_select %p220, %s219, 63
      %s222 = smul.addr %s221, 8
      %s223 = scalar_lea.vmem %s0, %s222
      %p224 = pneg %p38
      %p225 = pneg %p35
      %p226 = pneg %p59
      %p227 = pneg %p56
      %p228 = pneg %p80
      %p229 = pneg %p77
      %p230 = pneg %p101
      %p231 = pneg %p98
      %p232 = pneg %p122
      %p233 = pneg %p119
      %p234 = pneg %p143
      %p235 = pneg %p140
      %p236 = pneg %p169
      %p237 = pneg %p166
      %s238 = smul.u32 32, %s17
      %p239 = scmp.lt.s32.totalorder %s238, 63
      %s240 = scalar_select %p239, %s238, 63
      %s241 = smul.addr %s240, 4
      %s242 = scalar_lea.vmem %s6, %s241
      %s243 = smul.u32 32, %s17
      %p244 = scmp.lt.s32.totalorder %s243, 63
      %s245 = scalar_select %p244, %s243, 63
      %s246 = smul.addr %s245, 8
      %s247 = scalar_lea.vmem %s0, %s246
      %s248 = smul.u32 32, %s17
      %s249 = smul.u32 32, %s17
      %p250 = scmp.lt.s32.totalorder %s249, 63
      %s251 = scalar_select %p250, %s249, 63
      %s252 = smul.addr %s251, 4
      %s253 = scalar_lea.vmem %s6, %s252
      %s254 = smul.u32 32, %s17
      %v256 = vld [vmem:[%s247] sm:$0xff]
      %v257 = vld [vmem:[%s247 + $0x8] sm:$0xff]
      %v258 = vld [vmem:[%s247 + $0x10] sm:$0xff]
      %v259 = vld [vmem:[%s247 + $0x18] sm:$0xff]
      %v260 = vld [vmem:[%s247 + $0x20] sm:$0xff]
      %v261 = vld [vmem:[%s247 + $0x28] sm:$0xff]
      %v262 = vld [vmem:[%s247 + $0x30] sm:$0xff]
      %v263 = vld [vmem:[%s247 + $0x38] sm:$0xff]
      %v264 = vld [vmem:[%s247 + $0x40] sm:$0xff]
      %v265 = vld [vmem:[%s247 + $0x48] sm:$0xff]
      %v266 = vld [vmem:[%s247 + $0x50] sm:$0xff]
      %v267 = vld [vmem:[%s247 + $0x58] sm:$0xff]
      %v268 = vld [vmem:[%s247 + $0x60] sm:$0xff]
      %v269 = vld [vmem:[%s247 + $0x68] sm:$0xff]
      %v270 = vld [vmem:[%s247 + $0x70] sm:$0xff]
      %v271 = vld [vmem:[%s247 + $0x78] sm:$0xff]
      %v272 = vld [vmem:[%s247 + $0x80] sm:$0xff]
      %v273 = vld [vmem:[%s247 + $0x88] sm:$0xff]
      %v274 = vld [vmem:[%s247 + $0x90] sm:$0xff]
      %v275 = vld [vmem:[%s247 + $0x98] sm:$0xff]
      %v276 = vld [vmem:[%s247 + $0xa0] sm:$0xff]
      %v277 = vld [vmem:[%s247 + $0xa8] sm:$0xff]
      %v278 = vld [vmem:[%s247 + $0xb0] sm:$0xff]
      %v279 = vld [vmem:[%s247 + $0xb8] sm:$0xff]
      %v280 = vld [vmem:[%s247 + $0xc0] sm:$0xff]
      %v281 = vld [vmem:[%s247 + $0xc8] sm:$0xff]
      %v282 = vld [vmem:[%s247 + $0xd0] sm:$0xff]
      %v283 = vld [vmem:[%s247 + $0xd8] sm:$0xff]
      %v284 = vld [vmem:[%s247 + $0xe0] sm:$0xff]
      %v285 = vld [vmem:[%s247 + $0xe8] sm:$0xff]
      %v286 = vld [vmem:[%s247 + $0xf0] sm:$0xff]
      %v287 = vld [vmem:[%s247 + $0xf8] sm:$0xff]
      %v288 = vld [vmem:[%s1] sm:$0x1]
      %v290 = vperm.slane %v288, 0
      %v292 = vmul.f32 %v256, %v290
      %v293 = vmul.f32 %v257, %v290
      %v294 = vmul.f32 %v258, %v290
      %v295 = vmul.f32 %v259, %v290
      %v296 = vmul.f32 %v260, %v290
      %v297 = vmul.f32 %v261, %v290
      %v298 = vmul.f32 %v262, %v290
      %v299 = vmul.f32 %v263, %v290
      %v300 = vmul.f32 %v264, %v290
      %v301 = vmul.f32 %v265, %v290
      %v302 = vmul.f32 %v266, %v290
      %v303 = vmul.f32 %v267, %v290
      %v304 = vmul.f32 %v268, %v290
      %v305 = vmul.f32 %v269, %v290
      %v306 = vmul.f32 %v270, %v290
      %v307 = vmul.f32 %v271, %v290
      %v308 = vmul.f32 %v272, %v290
      %v309 = vmul.f32 %v273, %v290
      %v310 = vmul.f32 %v274, %v290
      %v311 = vmul.f32 %v275, %v290
      %v312 = vmul.f32 %v276, %v290
      %v313 = vmul.f32 %v277, %v290
      %v314 = vmul.f32 %v278, %v290
      %v315 = vmul.f32 %v279, %v290
      %v316 = vmul.f32 %v280, %v290
      %v317 = vmul.f32 %v281, %v290
      %v318 = vmul.f32 %v282, %v290
      %v319 = vmul.f32 %v283, %v290
      %v320 = vmul.f32 %v284, %v290
      %v321 = vmul.f32 %v285, %v290
      %v322 = vmul.f32 %v286, %v290
      %v323 = vmul.f32 %v287, %v290
      %v324 = vld [vmem:[%s2] sm:$0x1]
      %v326 = vperm.slane %v324, 0
      %v328 = vadd.f32 %v292, %v326
      %v329 = vadd.f32 %v293, %v326
      %v330 = vadd.f32 %v294, %v326
      %v331 = vadd.f32 %v295, %v326
      %v332 = vadd.f32 %v296, %v326
      %v333 = vadd.f32 %v297, %v326
      %v334 = vadd.f32 %v298, %v326
      %v335 = vadd.f32 %v299, %v326
      %v336 = vadd.f32 %v300, %v326
      %v337 = vadd.f32 %v301, %v326
      %v338 = vadd.f32 %v302, %v326
      %v339 = vadd.f32 %v303, %v326
      %v340 = vadd.f32 %v304, %v326
      %v341 = vadd.f32 %v305, %v326
      %v342 = vadd.f32 %v306, %v326
      %v343 = vadd.f32 %v307, %v326
      %v344 = vadd.f32 %v308, %v326
      %v345 = vadd.f32 %v309, %v326
      %v346 = vadd.f32 %v310, %v326
      %v347 = vadd.f32 %v311, %v326
      %v348 = vadd.f32 %v312, %v326
      %v349 = vadd.f32 %v313, %v326
      %v350 = vadd.f32 %v314, %v326
      %v351 = vadd.f32 %v315, %v326
      %v352 = vadd.f32 %v316, %v326
      %v353 = vadd.f32 %v317, %v326
      %v354 = vadd.f32 %v318, %v326
      %v355 = vadd.f32 %v319, %v326
      %v356 = vadd.f32 %v320, %v326
      %v357 = vadd.f32 %v321, %v326
      %v358 = vadd.f32 %v322, %v326
      %v359 = vadd.f32 %v323, %v326
      %v360 = vmax.f32 %v328, 0.0
      %v361 = vmax.f32 %v329, 0.0
      %v362 = vmax.f32 %v330, 0.0
      %v363 = vmax.f32 %v331, 0.0
      %v364 = vmax.f32 %v332, 0.0
      %v365 = vmax.f32 %v333, 0.0
      %v366 = vmax.f32 %v334, 0.0
      %v367 = vmax.f32 %v335, 0.0
      %v368 = vmax.f32 %v336, 0.0
      %v369 = vmax.f32 %v337, 0.0
      %v370 = vmax.f32 %v338, 0.0
      %v371 = vmax.f32 %v339, 0.0
      %v372 = vmax.f32 %v340, 0.0
      %v373 = vmax.f32 %v341, 0.0
      %v374 = vmax.f32 %v342, 0.0
      %v375 = vmax.f32 %v343, 0.0
      %v376 = vmax.f32 %v344, 0.0
      %v377 = vmax.f32 %v345, 0.0
      %v378 = vmax.f32 %v346, 0.0
      %v379 = vmax.f32 %v347, 0.0
      %v380 = vmax.f32 %v348, 0.0
      %v381 = vmax.f32 %v349, 0.0
      %v382 = vmax.f32 %v350, 0.0
      %v383 = vmax.f32 %v351, 0.0
      %v384 = vmax.f32 %v352, 0.0
      %v385 = vmax.f32 %v353, 0.0
      %v386 = vmax.f32 %v354, 0.0
      %v387 = vmax.f32 %v355, 0.0
      %v388 = vmax.f32 %v356, 0.0
      %v389 = vmax.f32 %v357, 0.0
      %v390 = vmax.f32 %v358, 0.0
      %v391 = vmax.f32 %v359, 0.0
      %v392 = vpack.c.bf16 %v361, %v360
      %v393 = vpack.c.bf16 %v363, %v362
      %v394 = vpack.c.bf16 %v365, %v364
      %v395 = vpack.c.bf16 %v367, %v366
      %v396 = vpack.c.bf16 %v369, %v368
      %v397 = vpack.c.bf16 %v371, %v370
      %v398 = vpack.c.bf16 %v373, %v372
      %v399 = vpack.c.bf16 %v375, %v374
      %v400 = vpack.c.bf16 %v377, %v376
      %v401 = vpack.c.bf16 %v379, %v378
      %v402 = vpack.c.bf16 %v381, %v380
      %v403 = vpack.c.bf16 %v383, %v382
      %v404 = vpack.c.bf16 %v385, %v384
      %v405 = vpack.c.bf16 %v387, %v386
      %v406 = vpack.c.bf16 %v389, %v388
      %v407 = vpack.c.bf16 %v391, %v390
      %v408 = vld [vmem:[%s3] sm:$0xf]
      %v409 = vld [vmem:[%s3 + $0x4] sm:$0xf]
      %v412 = vunpack.c.l.b16 %v408
      %v413 = vunpack.c.l.b16 %v409
      %v414 = vpack.c.b16 %v413, %v412
      %vm416 = vcmask 130048
      %v418 = vsel %vm416, %v392, 0
      %v421 = vsel %vm416, %v393, 0
      %v424 = vsel %vm416, %v394, 0
      %v427 = vsel %vm416, %v395, 0
      %v430 = vsel %vm416, %v396, 0
      %v433 = vsel %vm416, %v397, 0
      %v436 = vsel %vm416, %v398, 0
      %v439 = vsel %vm416, %v399, 0
      %v442 = vsel %vm416, %v400, 0
      %v445 = vsel %vm416, %v401, 0
      %v448 = vsel %vm416, %v402, 0
      %v451 = vsel %vm416, %v403, 0
      %v454 = vsel %vm416, %v404, 0
      %v457 = vsel %vm416, %v405, 0
      %v460 = vsel %vm416, %v406, 0
      %v463 = vsel %vm416, %v407, 0
      %465 = vmatpush.bf16.msra.mxu0 0
      %466 = vmatpush.bf16.msra.mxu0 0
      %467 = vmatpush.bf16.msra.mxu0 0
      %468 = vmatpush.bf16.msra.mxu0 0
      %469 = vmatpush.bf16.msra.mxu0 0
      %470 = vmatpush.bf16.msra.mxu0 0
      %471 = vmatpush.bf16.msra.mxu0 0
      %472 = vmatpush.bf16.msra.mxu0 %v414
      %473 = vmatmul.bf16.gmra.mxu0 %v418
      %v474 = vpop.f32.mrf.mxu0
      %v475 = vadd.f32 0.0, %v474
      %v476 = vpop.f32.mrf.mxu0
      %v477 = vadd.f32 0.0, %v476
      %478 = vmatmul.bf16.gmra.mxu0 %v421
      %v479 = vpop.f32.mrf.mxu0
      %v480 = vadd.f32 0.0, %v479
      %v481 = vpop.f32.mrf.mxu0
      %v482 = vadd.f32 0.0, %v481
      %483 = vmatmul.bf16.gmra.mxu0 %v424
      %v484 = vpop.f32.mrf.mxu0
      %v485 = vadd.f32 0.0, %v484
      %v486 = vpop.f32.mrf.mxu0
      %v487 = vadd.f32 0.0, %v486
      %488 = vmatmul.bf16.gmra.mxu0 %v427
      %v489 = vpop.f32.mrf.mxu0
      %v490 = vadd.f32 0.0, %v489
      %v491 = vpop.f32.mrf.mxu0
      %v492 = vadd.f32 0.0, %v491
      %493 = vmatmul.bf16.gmra.mxu0 %v430
      %v494 = vpop.f32.mrf.mxu0
      %v495 = vadd.f32 0.0, %v494
      %v496 = vpop.f32.mrf.mxu0
      %v497 = vadd.f32 0.0, %v496
      %498 = vmatmul.bf16.gmra.mxu0 %v433
      %v499 = vpop.f32.mrf.mxu0
      %v500 = vadd.f32 0.0, %v499
      %v501 = vpop.f32.mrf.mxu0
      %v502 = vadd.f32 0.0, %v501
      %503 = vmatmul.bf16.gmra.mxu0 %v436
      %v504 = vpop.f32.mrf.mxu0
      %v505 = vadd.f32 0.0, %v504
      %v506 = vpop.f32.mrf.mxu0
      %v507 = vadd.f32 0.0, %v506
      %508 = vmatmul.bf16.gmra.mxu0 %v439
      %v509 = vpop.f32.mrf.mxu0
      %v510 = vadd.f32 0.0, %v509
      %v511 = vpop.f32.mrf.mxu0
      %v512 = vadd.f32 0.0, %v511
      %513 = vmatmul.bf16.gmra.mxu0 %v442
      %v514 = vpop.f32.mrf.mxu0
      %v515 = vadd.f32 0.0, %v514
      %v516 = vpop.f32.mrf.mxu0
      %v517 = vadd.f32 0.0, %v516
      %518 = vmatmul.bf16.gmra.mxu0 %v445
      %v519 = vpop.f32.mrf.mxu0
      %v520 = vadd.f32 0.0, %v519
      %v521 = vpop.f32.mrf.mxu0
      %v522 = vadd.f32 0.0, %v521
      %523 = vmatmul.bf16.gmra.mxu0 %v448
      %v524 = vpop.f32.mrf.mxu0
      %v525 = vadd.f32 0.0, %v524
      %v526 = vpop.f32.mrf.mxu0
      %v527 = vadd.f32 0.0, %v526
      %528 = vmatmul.bf16.gmra.mxu0 %v451
      %v529 = vpop.f32.mrf.mxu0
      %v530 = vadd.f32 0.0, %v529
      %v531 = vpop.f32.mrf.mxu0
      %v532 = vadd.f32 0.0, %v531
      %533 = vmatmul.bf16.gmra.mxu0 %v454
      %v534 = vpop.f32.mrf.mxu0
      %v535 = vadd.f32 0.0, %v534
      %v536 = vpop.f32.mrf.mxu0
      %v537 = vadd.f32 0.0, %v536
      %538 = vmatmul.bf16.gmra.mxu0 %v457
      %v539 = vpop.f32.mrf.mxu0
      %v540 = vadd.f32 0.0, %v539
      %v541 = vpop.f32.mrf.mxu0
      %v542 = vadd.f32 0.0, %v541
      %543 = vmatmul.bf16.gmra.mxu0 %v460
      %v544 = vpop.f32.mrf.mxu0
      %v545 = vadd.f32 0.0, %v544
      %v546 = vpop.f32.mrf.mxu0
      %v547 = vadd.f32 0.0, %v546
      %548 = vmatmul.bf16.gmra.mxu0 %v463
      %v549 = vpop.f32.mrf.mxu0
      %v550 = vadd.f32 0.0, %v549
      %v551 = vpop.f32.mrf.mxu0
      %v552 = vadd.f32 0.0, %v551
      %553 = vdwg.mxu0
      %v554 = vld [vmem:[%s4] sm:$0x1]
      %v556 = vperm.slane %v554, 0
      %v558 = vmul.f32 %v475, %v556
      %v559 = vmul.f32 %v477, %v556
      %v560 = vmul.f32 %v480, %v556
      %v561 = vmul.f32 %v482, %v556
      %v562 = vmul.f32 %v485, %v556
      %v563 = vmul.f32 %v487, %v556
      %v564 = vmul.f32 %v490, %v556
      %v565 = vmul.f32 %v492, %v556
      %v566 = vmul.f32 %v495, %v556
      %v567 = vmul.f32 %v497, %v556
      %v568 = vmul.f32 %v500, %v556
      %v569 = vmul.f32 %v502, %v556
      %v570 = vmul.f32 %v505, %v556
      %v571 = vmul.f32 %v507, %v556
      %v572 = vmul.f32 %v510, %v556
      %v573 = vmul.f32 %v512, %v556
      %v574 = vmul.f32 %v515, %v556
      %v575 = vmul.f32 %v517, %v556
      %v576 = vmul.f32 %v520, %v556
      %v577 = vmul.f32 %v522, %v556
      %v578 = vmul.f32 %v525, %v556
      %v579 = vmul.f32 %v527, %v556
      %v580 = vmul.f32 %v530, %v556
      %v581 = vmul.f32 %v532, %v556
      %v582 = vmul.f32 %v535, %v556
      %v583 = vmul.f32 %v537, %v556
      %v584 = vmul.f32 %v540, %v556
      %v585 = vmul.f32 %v542, %v556
      %v586 = vmul.f32 %v545, %v556
      %v587 = vmul.f32 %v547, %v556
      %v588 = vmul.f32 %v550, %v556
      %v589 = vmul.f32 %v552, %v556
      %v590 = vld [vmem:[%s5] sm:$0x1]
      %v592 = vperm.slane %v590, 0
      %v594 = vadd.f32 %v558, %v592
      %v595 = vadd.f32 %v559, %v592
      %v596 = vadd.f32 %v560, %v592
      %v597 = vadd.f32 %v561, %v592
      %v598 = vadd.f32 %v562, %v592
      %v599 = vadd.f32 %v563, %v592
      %v600 = vadd.f32 %v564, %v592
      %v601 = vadd.f32 %v565, %v592
      %v602 = vadd.f32 %v566, %v592
      %v603 = vadd.f32 %v567, %v592
      %v604 = vadd.f32 %v568, %v592
      %v605 = vadd.f32 %v569, %v592
      %v606 = vadd.f32 %v570, %v592
      %v607 = vadd.f32 %v571, %v592
      %v608 = vadd.f32 %v572, %v592
      %v609 = vadd.f32 %v573, %v592
      %v610 = vadd.f32 %v574, %v592
      %v611 = vadd.f32 %v575, %v592
      %v612 = vadd.f32 %v576, %v592
      %v613 = vadd.f32 %v577, %v592
      %v614 = vadd.f32 %v578, %v592
      %v615 = vadd.f32 %v579, %v592
      %v616 = vadd.f32 %v580, %v592
      %v617 = vadd.f32 %v581, %v592
      %v618 = vadd.f32 %v582, %v592
      %v619 = vadd.f32 %v583, %v592
      %v620 = vadd.f32 %v584, %v592
      %v621 = vadd.f32 %v585, %v592
      %v622 = vadd.f32 %v586, %v592
      %v623 = vadd.f32 %v587, %v592
      %v624 = vadd.f32 %v588, %v592
      %v625 = vadd.f32 %v589, %v592
      %v626 = vmax.f32 %v594, 0.0
      %v627 = vmax.f32 %v595, 0.0
      %v628 = vmax.f32 %v596, 0.0
      %v629 = vmax.f32 %v597, 0.0
      %v630 = vmax.f32 %v598, 0.0
      %v631 = vmax.f32 %v599, 0.0
      %v632 = vmax.f32 %v600, 0.0
      %v633 = vmax.f32 %v601, 0.0
      %v634 = vmax.f32 %v602, 0.0
      %v635 = vmax.f32 %v603, 0.0
      %v636 = vmax.f32 %v604, 0.0
      %v637 = vmax.f32 %v605, 0.0
      %v638 = vmax.f32 %v606, 0.0
      %v639 = vmax.f32 %v607, 0.0
      %v640 = vmax.f32 %v608, 0.0
      %v641 = vmax.f32 %v609, 0.0
      %v642 = vmax.f32 %v610, 0.0
      %v643 = vmax.f32 %v611, 0.0
      %v644 = vmax.f32 %v612, 0.0
      %v645 = vmax.f32 %v613, 0.0
      %v646 = vmax.f32 %v614, 0.0
      %v647 = vmax.f32 %v615, 0.0
      %v648 = vmax.f32 %v616, 0.0
      %v649 = vmax.f32 %v617, 0.0
      %v650 = vmax.f32 %v618, 0.0
      %v651 = vmax.f32 %v619, 0.0
      %v652 = vmax.f32 %v620, 0.0
      %v653 = vmax.f32 %v621, 0.0
      %v654 = vmax.f32 %v622, 0.0
      %v655 = vmax.f32 %v623, 0.0
      %v656 = vmax.f32 %v624, 0.0
      %v657 = vmax.f32 %v625, 0.0
      %v658 = vpack.c.bf16 %v626, %v626
      %v659 = vpack.c.bf16 %v627, %v627
      %v660 = vpack.c.bf16 %v628, %v628
      %v661 = vpack.c.bf16 %v629, %v629
      %v662 = vpack.c.bf16 %v630, %v630
      %v663 = vpack.c.bf16 %v631, %v631
      %v664 = vpack.c.bf16 %v632, %v632
      %v665 = vpack.c.bf16 %v633, %v633
      %v666 = vpack.c.bf16 %v634, %v634
      %v667 = vpack.c.bf16 %v635, %v635
      %v668 = vpack.c.bf16 %v636, %v636
      %v669 = vpack.c.bf16 %v637, %v637
      %v670 = vpack.c.bf16 %v638, %v638
      %v671 = vpack.c.bf16 %v639, %v639
      %v672 = vpack.c.bf16 %v640, %v640
      %v673 = vpack.c.bf16 %v641, %v641
      %v674 = vpack.c.bf16 %v642, %v642
      %v675 = vpack.c.bf16 %v643, %v643
      %v676 = vpack.c.bf16 %v644, %v644
      %v677 = vpack.c.bf16 %v645, %v645
      %v678 = vpack.c.bf16 %v646, %v646
      %v679 = vpack.c.bf16 %v647, %v647
      %v680 = vpack.c.bf16 %v648, %v648
      %v681 = vpack.c.bf16 %v649, %v649
      %v682 = vpack.c.bf16 %v650, %v650
      %v683 = vpack.c.bf16 %v651, %v651
      %v684 = vpack.c.bf16 %v652, %v652
      %v685 = vpack.c.bf16 %v653, %v653
      %v686 = vpack.c.bf16 %v654, %v654
      %v687 = vpack.c.bf16 %v655, %v655
      %v688 = vpack.c.bf16 %v656, %v656
      %v689 = vpack.c.bf16 %v657, %v657
      %690 = vst [vmem:[%s253] sm:$0xf] %v658
      %691 = vst [vmem:[%s253 + $0x4] sm:$0xf] %v659
      %692 = vst [vmem:[%s253 + $0x8] sm:$0xf] %v660
      %693 = vst [vmem:[%s253 + $0xc] sm:$0xf] %v661
      %694 = vst [vmem:[%s253 + $0x10] sm:$0xf] %v662
      %695 = vst [vmem:[%s253 + $0x14] sm:$0xf] %v663
      %696 = vst [vmem:[%s253 + $0x18] sm:$0xf] %v664
      %697 = vst [vmem:[%s253 + $0x1c] sm:$0xf] %v665
      %698 = vst [vmem:[%s253 + $0x20] sm:$0xf] %v666
      %699 = vst [vmem:[%s253 + $0x24] sm:$0xf] %v667
      %700 = vst [vmem:[%s253 + $0x28] sm:$0xf] %v668
      %701 = vst [vmem:[%s253 + $0x2c] sm:$0xf] %v669
      %702 = vst [vmem:[%s253 + $0x30] sm:$0xf] %v670
      %703 = vst [vmem:[%s253 + $0x34] sm:$0xf] %v671
      %704 = vst [vmem:[%s253 + $0x38] sm:$0xf] %v672
      %705 = vst [vmem:[%s253 + $0x3c] sm:$0xf] %v673
      %706 = vst [vmem:[%s253 + $0x40] sm:$0xf] %v674
      %707 = vst [vmem:[%s253 + $0x44] sm:$0xf] %v675
      %708 = vst [vmem:[%s253 + $0x48] sm:$0xf] %v676
      %709 = vst [vmem:[%s253 + $0x4c] sm:$0xf] %v677
      %710 = vst [vmem:[%s253 + $0x50] sm:$0xf] %v678
      %711 = vst [vmem:[%s253 + $0x54] sm:$0xf] %v679
      %712 = vst [vmem:[%s253 + $0x58] sm:$0xf] %v680
      %713 = vst [vmem:[%s253 + $0x5c] sm:$0xf] %v681
      %714 = vst [vmem:[%s253 + $0x60] sm:$0xf] %v682
      %715 = vst [vmem:[%s253 + $0x64] sm:$0xf] %v683
      %716 = vst [vmem:[%s253 + $0x68] sm:$0xf] %v684
      %717 = vst [vmem:[%s253 + $0x6c] sm:$0xf] %v685
      %718 = vst [vmem:[%s253 + $0x70] sm:$0xf] %v686
      %719 = vst [vmem:[%s253 + $0x74] sm:$0xf] %v687
      %720 = vst [vmem:[%s253 + $0x78] sm:$0xf] %v688
      %721 = vst [vmem:[%s253 + $0x7c] sm:$0xf] %v689
      %s722 = smul.u32 32, %s17
      %p723 = scmp.lt.s32.totalorder %s722, 63
      %s724 = scalar_select %p723, %s722, 63
      %s725 = smul.addr %s724, 4
      %s726 = scalar_lea.vmem %s6, %s725
      // Predicated region
      $region45: #{_lambda_.6} parent=43 // pred_check
        %p727 = pneg %p166
      $region46: #{_lambda_.6} parent=43 // pred_check_branch
        %729 = sbr.rel (%p727) target = $region48
      $region47: #{_lambda_.6} parent=43 // pred_region
        %s730 = smul.u32 32, %s17
      $region48: #{_lambda_.6} parent=43 // pred_fallthru
        _
    $region44: #{_lambda_.6} parent=5 // pred_fallthru
      _
    %p731 = scmp.le.s32.totalorder 2, %s12
    // Predicated region
    $region49: #{_lambda_.6} parent=5 // pred_check
      %p732 = pneg %p731
    $region50: #{_lambda_.6} parent=5 // pred_check_branch
      %734 = sbr.rel (%p732) target = $region52
    $region51: #{_lambda_.6} parent=5 // pred_region
      %s735 = ssub.s32 %s12, 2
      // Predicated region
      $region53: #{_lambda_.6} parent=51 // pred_check
        %p736 = pneg %p172
      $region54: #{_lambda_.6} parent=51 // pred_check_branch
        %738 = sbr.rel (%p736) target = $region56
      $region55: #{_lambda_.6} parent=51 // pred_region
        %s739 = smul.u32 32, %s18
        %p740 = scmp.lt.s32.totalorder %s739, 63
        %s741 = scalar_select %p740, %s739, 63
        %s742 = smul.addr %s741, 4
        %s743 = scalar_lea.vmem %s6, %s742
      $region56: #{_lambda_.6} parent=51 // pred_fallthru
        _
    $region52: #{_lambda_.6} parent=5 // pred_fallthru
      _
  $region6: #{_lambda_.6} parent=0 // loop_footer
    %s16 = sadd.s32 1, %s12
  $region7: #{_lambda_.6} parent=0 // loop_footer_branch
    %11 = sbr.rel target = $region3
  $region8: #{_lambda_.6} parent=0 // loop_exit
    _

// kernel: _lambda_.7
$region0: #{_lambda_.7}
  #allocation0 [shape = 'u32[]', space=smem, size = 0x4, offset = 0x4, fixed_abs, tag = 'smem constant byte address 0x4 - core index']
  #allocation1 [shape = 'u32[72,128]{1,0:T(1,128)}', space=vmem, size = 0x9000, scoped, tag = 'internal scratch']
  %s0 = inlined_call_operand.vmem [shape: bf16[2,18,18,128], index: 0, kind: input, shape index: {}]
  %s1 = inlined_call_operand.vmem [shape: bf16[1152,4], index: 1, kind: input, shape index: {}]
  %s2 = inlined_call_operand.vmem [shape: f32[2,16,16,4], index: 2, kind: output, shape index: {}]
  %s3 = sld [smem:[#allocation0]]
  $region41: #{_lambda_.7} parent=0
    _
  %s5 = ssub.s32 1, %s3
  %s6 = scalar_select 0, %s5, %s3
  loop: start=0, step=1, limit=4
  $region2: #{_lambda_.7} parent=0 // loop_pre_header
    _
  $region3: #{_lambda_.7} parent=0 // loop_header
    %s8 = sphi 0, %s12
    %p9 = scmp.ge.s32.totalorder %s8, 4
    %s18 = sphi 0, %s20
    %s21 = sphi 0, %s18
    %s22 = sphi 0, %s21
    %s38 = sphi 0, %s22
    %s42 = sphi 0, %s42
    %s44 = sphi 0, %s42
    %s45 = sphi 0, %s44
    %s59 = sphi 0, %s45
    %s65 = sphi 0, %s67
    %s68 = sphi 0, %s65
    %s69 = sphi 0, %s68
    %s85 = sphi 0, %s69
  $region4: #{_lambda_.7} parent=0 // loop_header_branch
    %11 = sbr.rel (%p9) target = $region8
  $region5: #{_lambda_.7} parent=0 // loop_body
    %s13 = ssub.s32 %s8, 1
    %s14 = ssub.s32 %s8, 2
    %s15 = sadd.s32 %s8, 1
    %s16 = ssub.s32 %s8, %s15
    %p17 = scmp.eq.s32.totalorder %s16, 0
    %s19 = sadd.s32 %s18, 1
    %s20 = scalar_select %p17, %s18, %s19
    %p23 = pneg %p17
    %p24 = scmp.eq.s32.totalorder %s8, 1
    %p25 = por %p23, %p24
    %p26 = scmp.ne.s32.totalorder %s18, %s21
    %p27 = scmp.eq.s32.totalorder %s8, 0
    %p28 = por %p26, %p27
    %p29 = scmp.ne.s32.totalorder %s18, %s21
    %p30 = scmp.eq.s32.totalorder %s13, 1
    %p31 = por %p29, %p30
    %p32 = scmp.ne.s32.totalorder %s21, %s22
    %p33 = scmp.eq.s32.totalorder %s13, 0
    %p34 = por %p32, %p33
    %p35 = scmp.ne.s32.totalorder %s21, %s22
    %p36 = scmp.eq.s32.totalorder %s14, 1
    %p37 = por %p35, %p36
    %p39 = scmp.ne.s32.totalorder %s22, %s38
    %p40 = scmp.eq.s32.totalorder %s14, 0
    %p41 = por %p39, %p40
    %s43 = sadd.s32 %s42, 1
    %p46 = scmp.eq.s32.totalorder %s8, 1
    %p47 = scmp.ne.s32.totalorder %s42, %s44
    %p48 = scmp.eq.s32.totalorder %s8, 0
    %p49 = por %p47, %p48
    %p50 = scmp.ne.s32.totalorder %s42, %s44
    %p51 = scmp.eq.s32.totalorder %s13, 1
    %p52 = por %p50, %p51
    %p53 = scmp.ne.s32.totalorder %s44, %s45
    %p54 = scmp.eq.s32.totalorder %s13, 0
    %p55 = por %p53, %p54
    %p56 = scmp.ne.s32.totalorder %s44, %s45
    %p57 = scmp.eq.s32.totalorder %s14, 1
    %p58 = por %p56, %p57
    %p60 = scmp.ne.s32.totalorder %s45, %s59
    %p61 = scmp.eq.s32.totalorder %s14, 0
    %p62 = por %p60, %p61
    %s63 = ssub.s32 %s8, %s15
    %p64 = scmp.eq.s32.totalorder %s63, 0
    %s66 = sadd.s32 %s65, 1
    %s67 = scalar_select %p64, %s65, %s66
    %p70 = pneg %p64
    %p71 = scmp.eq.s32.totalorder %s8, 1
    %p72 = por %p70, %p71
    %p73 = scmp.ne.s32.totalorder %s65, %s68
    %p74 = scmp.eq.s32.totalorder %s8, 0
    %p75 = por %p73, %p74
    %p76 = scmp.ne.s32.totalorder %s65, %s68
    %p77 = scmp.eq.s32.totalorder %s13, 1
    %p78 = por %p76, %p77
    %p79 = scmp.ne.s32.totalorder %s68, %s69
    %p80 = scmp.eq.s32.totalorder %s13, 0
    %p81 = por %p79, %p80
    %p82 = scmp.ne.s32.totalorder %s68, %s69
    %p83 = scmp.eq.s32.totalorder %s14, 1
    %p84 = por %p82, %p83
    %p86 = scmp.ne.s32.totalorder %s69, %s85
    %p87 = scmp.eq.s32.totalorder %s14, 0
    %p88 = por %p86, %p87
    %p89 = scmp.le.s32.totalorder 1, %s8
    %p90 = scmp.lt.s32.totalorder %s8, 3
    %p91 = pnand %p89, %p90
    %p92 = pneg %p91
    // Predicated region
    $region9: #{_lambda_.7} parent=5 // pred_check
      _
    $region10: #{_lambda_.7} parent=5 // pred_check_branch
      %94 = sbr.rel (%p91) target = $region12
    $region11: #{_lambda_.7} parent=5 // pred_region
      %s95 = ssub.s32 %s8, 1
      // Predicated region
      $region13: #{_lambda_.7} parent=11 // pred_check
        %p96 = pneg %p55
      $region14: #{_lambda_.7} parent=11 // pred_check_branch
        %98 = sbr.rel (%p96) target = $region16
      $region15: #{_lambda_.7} parent=11 // pred_region
        _
      $region16: #{_lambda_.7} parent=11 // pred_fallthru
        _
    $region12: #{_lambda_.7} parent=5 // pred_fallthru
      _
    %p99 = scmp.lt.s32.totalorder %s8, 2
    // Predicated region
    $region17: #{_lambda_.7} parent=5 // pred_check
      %p100 = pneg %p99
    $region18: #{_lambda_.7} parent=5 // pred_check_branch
      %102 = sbr.rel (%p100) target = $region20
    $region19: #{_lambda_.7} parent=5 // pred_region
      // Predicated region
      $region21: #{_lambda_.7} parent=19 // pred_check
        %p103 = pneg %p28
      $region22: #{_lambda_.7} parent=19 // pred_check_branch
        %105 = sbr.rel (%p103) target = $region24
      $region23: #{_lambda_.7} parent=19 // pred_region
        %p106 = scmp.lt.s32.totalorder %s8, 1
        %s107 = scalar_select %p106, %s8, 1
        %s108 = smul.addr %s107, 54
        %s109 = smul.addr %s108, 4
        %s110 = scalar_lea.vmem %s0, %s109
      $region24: #{_lambda_.7} parent=19 // pred_fallthru
        _
    $region20: #{_lambda_.7} parent=5 // pred_fallthru
      _
    %p111 = scmp.le.s32.totalorder 1, %s8
    %p112 = scmp.lt.s32.totalorder %s8, 3
    %p113 = pnand %p111, %p112
    %p114 = pneg %p113
    // Predicated region
    $region25: #{_lambda_.7} parent=5 // pred_check
      _
    $region26: #{_lambda_.7} parent=5 // pred_check_branch
      %116 = sbr.rel (%p113) target = $region28
    $region27: #{_lambda_.7} parent=5 // pred_region
      %s117 = ssub.s32 %s8, 1
      %p118 = scmp.lt.s32.totalorder %s13, 1
      %s119 = scalar_select %p118, %s13, 1
      %s120 = smul.addr %s119, 54
      %s121 = smul.addr %s120, 4
      %s122 = scalar_lea.vmem %s0, %s121
      %p123 = pneg %p34
      %p124 = pneg %p31
      %p125 = pneg %p55
      %p126 = pneg %p52
      %p127 = pneg %p81
      %p128 = pneg %p78
      %p129 = scmp.lt.s32.totalorder %s13, 1
      %s130 = scalar_select %p129, %s13, 1
      %s131 = smul.addr %s130, 32
      %s132 = smul.addr %s131, 8
      %s133 = scalar_lea.vmem %s2, %s132
      %p134 = scmp.lt.s32.totalorder %s13, 1
      %s135 = scalar_select %p134, %s13, 1
      %s136 = smul.addr %s135, 54
      %s137 = smul.addr %s136, 4
      %s138 = scalar_lea.vmem %s0, %s137
      %p139 = scmp.lt.s32.totalorder %s13, 1
      %s140 = scalar_select %p139, %s13, 1
      %s141 = smul.addr %s140, 32
      %s142 = smul.addr %s141, 8
      %s143 = scalar_lea.vmem %s2, %s142
      %v144 = vld [vmem:[%s138] sm:$0xf]
      %v145 = vld [vmem:[%s138 + $0x4] sm:$0xf]
      %v146 = vld [vmem:[%s138 + $0x8] sm:$0x1]
      %v147 = vld [vmem:[%s138 + $0xc] sm:$0xf]
      %v148 = vld [vmem:[%s138 + $0x10] sm:$0xf]
      %v149 = vld [vmem:[%s138 + $0x14] sm:$0x1]
      %v150 = vld [vmem:[%s138 + $0x18] sm:$0xf]
      %v151 = vld [vmem:[%s138 + $0x1c] sm:$0xf]
      %v152 = vld [vmem:[%s138 + $0x20] sm:$0x1]
      %v153 = vld [vmem:[%s138 + $0x24] sm:$0xf]
      %v154 = vld [vmem:[%s138 + $0x28] sm:$0xf]
      %v155 = vld [vmem:[%s138 + $0x2c] sm:$0x1]
      %v156 = vld [vmem:[%s138 + $0x30] sm:$0xf]
      %v157 = vld [vmem:[%s138 + $0x34] sm:$0xf]
      %v158 = vld [vmem:[%s138 + $0x38] sm:$0x1]
      %v159 = vld [vmem:[%s138 + $0x3c] sm:$0xf]
      %v160 = vld [vmem:[%s138 + $0x40] sm:$0xf]
      %v161 = vld [vmem:[%s138 + $0x44] sm:$0x1]
      %v162 = vld [vmem:[%s138 + $0x48] sm:$0xf]
      %v163 = vld [vmem:[%s138 + $0x4c] sm:$0xf]
      %v164 = vld [vmem:[%s138 + $0x50] sm:$0x1]
      %v165 = vld [vmem:[%s138 + $0x54] sm:$0xf]
      %v166 = vld [vmem:[%s138 + $0x58] sm:$0xf]
      %v167 = vld [vmem:[%s138 + $0x5c] sm:$0x1]
      %v168 = vld [vmem:[%s138 + $0x60] sm:$0xf]
      %v169 = vld [vmem:[%s138 + $0x64] sm:$0xf]
      %v170 = vld [vmem:[%s138 + $0x68] sm:$0x1]
      %v171 = vld [vmem:[%s138 + $0x6c] sm:$0xf]
      %v172 = vld [vmem:[%s138 + $0x70] sm:$0xf]
      %v173 = vld [vmem:[%s138 + $0x74] sm:$0x1]
      %v174 = vld [vmem:[%s138 + $0x78] sm:$0xf]
      %v175 = vld [vmem:[%s138 + $0x7c] sm:$0xf]
      %v176 = vld [vmem:[%s138 + $0x80] sm:$0x1]
      %v177 = vld [vmem:[%s138 + $0x84] sm:$0xf]
      %v178 = vld [vmem:[%s138 + $0x88] sm:$0xf]
      %v179 = vld [vmem:[%s138 + $0x8c] sm:$0x1]
      %v180 = vld [vmem:[%s138 + $0x90] sm:$0xf]
      %v181 = vld [vmem:[%s138 + $0x94] sm:$0xf]
      %v182 = vld [vmem:[%s138 + $0x98] sm:$0x1]
      %v183 = vld [vmem:[%s138 + $0x9c] sm:$0xf]
      %v184 = vld [vmem:[%s138 + $0xa0] sm:$0xf]
      %v185 = vld [vmem:[%s138 + $0xa4] sm:$0x1]
      %v186 = vld [vmem:[%s138 + $0xa8] sm:$0xf]
      %v187 = vld [vmem:[%s138 + $0xac] sm:$0xf]
      %v188 = vld [vmem:[%s138 + $0xb0] sm:$0x1]
      %v189 = vld [vmem:[%s138 + $0xb4] sm:$0xf]
      %v190 = vld [vmem:[%s138 + $0xb8] sm:$0xf]
      %v191 = vld [vmem:[%s138 + $0xbc] sm:$0x1]
      %v192 = vld [vmem:[%s138 + $0xc0] sm:$0xf]
      %v193 = vld [vmem:[%s138 + $0xc4] sm:$0xf]
      %v194 = vld [vmem:[%s138 + $0xc8] sm:$0x1]
      %v195 = vld [vmem:[%s138 + $0xcc] sm:$0xf]
      %v196 = vld [vmem:[%s138 + $0xd0] sm:$0xf]
      %v197 = vld [vmem:[%s138 + $0xd4] sm:$0x1]
      %vm198 = vsmask.f32 3328
      %vm199 = vsmask.f32 7440
      %vm200 = vmor %vm198, %vm199
      %v202 = vshrl.u32 %v144, 16
      %v204 = vrot.slane %v202, 4
      %v205 = vshll.u32 %v144, 16
      %v207 = vrot.slane %v205, 5
      %v208 = vor.u32 %v204, %v207
      %v209 = vrot.slane %v208, 4
      %v211 = vshll.u32 %v145, 16
      %v213 = vrot.slane %v211, 5
      %v214 = vsel %vm200, %v209, %v213
      %v215 = vshrl.u32 %v145, 16
      %v217 = vrot.slane %v215, 4
      %v218 = vor.u32 %v217, %v213
      %v219 = vrot.slane %v218, 4
      %v221 = vshll.u32 %v146, 16
      %v223 = vrot.slane %v221, 5
      %v224 = vsel %vm200, %v219, %v223
      %v226 = vshrl.u32 %v147, 16
      %v228 = vrot.slane %v226, 4
      %v229 = vshll.u32 %v147, 16
      %v231 = vrot.slane %v229, 5
      %v232 = vor.u32 %v228, %v231
      %v233 = vrot.slane %v232, 4
      %v235 = vshll.u32 %v148, 16
      %v237 = vrot.slane %v235, 5
      %v238 = vsel %vm200, %v233, %v237
      %v239 = vshrl.u32 %v148, 16
      %v241 = vrot.slane %v239, 4
      %v242 = vor.u32 %v241, %v237
      %v243 = vrot.slane %v242, 4
      %v245 = vshll.u32 %v149, 16
      %v247 = vrot.slane %v245, 5
      %v248 = vsel %vm200, %v243, %v247
      %v250 = vshrl.u32 %v150, 16
      %v252 = vrot.slane %v250, 4
      %v253 = vshll.u32 %v150, 16
      %v255 = vrot.slane %v253, 5
      %v256 = vor.u32 %v252, %v255
      %v257 = vrot.slane %v256, 4
      %v259 = vshll.u32 %v151, 16
      %v261 = vrot.slane %v259, 5
      %v262 = vsel %vm200, %v257, %v261
      %v263 = vshrl.u32 %v151, 16
      %v265 = vrot.slane %v263, 4
      %v266 = vor.u32 %v265, %v261
      %v267 = vrot.slane %v266, 4
      %v269 = vshll.u32 %v152, 16
      %v271 = vrot.slane %v269, 5
      %v272 = vsel %vm200, %v267, %v271
      %v274 = vshrl.u32 %v153, 16
      %v276 = vrot.slane %v274, 4
      %v277 = vshll.u32 %v153, 16
      %v279 = vrot.slane %v277, 5
      %v280 = vor.u32 %v276, %v279
      %v281 = vrot.slane %v280, 4
      %v283 = vshll.u32 %v154, 16
      %v285 = vrot.slane %v283, 5
      %v286 = vsel %vm200, %v281, %v285
      %v287 = vshrl.u32 %v154, 16
      %v289 = vrot.slane %v287, 4
      %v290 = vor.u32 %v289, %v285
      %v291 = vrot.slane %v290, 4
      %v293 = vshll.u32 %v155, 16
      %v295 = vrot.slane %v293, 5
      %v296 = vsel %vm200, %v291, %v295
      %v298 = vshrl.u32 %v156, 16
      %v300 = vrot.slane %v298, 4
      %v301 = vshll.u32 %v156, 16
      %v303 = vrot.slane %v301, 5
      %v304 = vor.u32 %v300, %v303
      %v305 = vrot.slane %v304, 4
      %v307 = vshll.u32 %v157, 16
      %v309 = vrot.slane %v307, 5
      %v310 = vsel %vm200, %v305, %v309
      %v311 = vshrl.u32 %v157, 16
      %v313 = vrot.slane %v311, 4
      %v314 = vor.u32 %v313, %v309
      %v315 = vrot.slane %v314, 4
      %v317 = vshll.u32 %v158, 16
      %v319 = vrot.slane %v317, 5
      %v320 = vsel %vm200, %v315, %v319
      %v322 = vshrl.u32 %v159, 16
      %v324 = vrot.slane %v322, 4
      %v325 = vshll.u32 %v159, 16
      %v327 = vrot.slane %v325, 5
      %v328 = vor.u32 %v324, %v327
      %v329 = vrot.slane %v328, 4
      %v331 = vshll.u32 %v160, 16
      %v333 = vrot.slane %v331, 5
      %v334 = vsel %vm200, %v329, %v333
      %v335 = vshrl.u32 %v160, 16
      %v337 = vrot.slane %v335, 4
      %v338 = vor.u32 %v337, %v333
      %v339 = vrot.slane %v338, 4
      %v341 = vshll.u32 %v161, 16
      %v343 = vrot.slane %v341, 5
      %v344 = vsel %vm200, %v339, %v343
      %v346 = vshrl.u32 %v162, 16
      %v348 = vrot.slane %v346, 4
      %v349 = vshll.u32 %v162, 16
      %v351 = vrot.slane %v349, 5
      %v352 = vor.u32 %v348, %v351
      %v353 = vrot.slane %v352, 4
      %v355 = vshll.u32 %v163, 16
      %v357 = vrot.slane %v355, 5
      %v358 = vsel %vm200, %v353, %v357
      %v359 = vshrl.u32 %v163, 16
      %v361 = vrot.slane %v359, 4
      %v362 = vor.u32 %v361, %v357
      %v363 = vrot.slane %v362, 4
      %v365 = vshll.u32 %v164, 16
      %v367 = vrot.slane %v365, 5
      %v368 = vsel %vm200, %v363, %v367
      %v370 = vshrl.u32 %v165, 16
      %v372 = vrot.slane %v370, 4
      %v373 = vshll.u32 %v165, 16
      %v375 = vrot.slane %v373, 5
      %v376 = vor.u32 %v372, %v375
      %v377 = vrot.slane %v376, 4
      %v379 = vshll.u32 %v166, 16
      %v381 = vrot.slane %v379, 5
      %v382 = vsel %vm200, %v377, %v381
      %v383 = vshrl.u32 %v166, 16
      %v385 = vrot.slane %v383, 4
      %v386 = vor.u32 %v385, %v381
      %v387 = vrot.slane %v386, 4
      %v389 = vshll.u32 %v167, 16
      %v391 = vrot.slane %v389, 5
      %v392 = vsel %vm200, %v387, %v391
      %v394 = vshrl.u32 %v168, 16
      %v396 = vrot.slane %v394, 4
      %v397 = vshll.u32 %v168, 16
      %v399 = vrot.slane %v397, 5
      %v400 = vor.u32 %v396, %v399
      %v401 = vrot.slane %v400, 4
      %v403 = vshll.u32 %v169, 16
      %v405 = vrot.slane %v403, 5
      %v406 = vsel %vm200, %v401, %v405
      %v407 = vshrl.u32 %v169, 16
      %v409 = vrot.slane %v407, 4
      %v410 = vor.u32 %v409, %v405
      %v411 = vrot.slane %v410, 4
      %v413 = vshll.u32 %v170, 16
      %v415 = vrot.slane %v413, 5
      %v416 = vsel %vm200, %v411, %v415
      %v418 = vshrl.u32 %v171, 16
      %v420 = vrot.slane %v418, 4
      %v421 = vshll.u32 %v171, 16
      %v423 = vrot.slane %v421, 5
      %v424 = vor.u32 %v420, %v423
      %v425 = vrot.slane %v424, 4
      %v427 = vshll.u32 %v172, 16
      %v429 = vrot.slane %v427, 5
      %v430 = vsel %vm200, %v425, %v429
      %v431 = vshrl.u32 %v172, 16
      %v433 = vrot.slane %v431, 4
      %v434 = vor.u32 %v433, %v429
      %v435 = vrot.slane %v434, 4
      %v437 = vshll.u32 %v173, 16
      %v439 = vrot.slane %v437, 5
      %v440 = vsel %vm200, %v435, %v439
      %v442 = vshrl.u32 %v174, 16
      %v444 = vrot.slane %v442, 4
      %v445 = vshll.u32 %v174, 16
      %v447 = vrot.slane %v445, 5
      %v448 = vor.u32 %v444, %v447
      %v449 = vrot.slane %v448, 4
      %v451 = vshll.u32 %v175, 16
      %v453 = vrot.slane %v451, 5
      %v454 = vsel %vm200, %v449, %v453
      %v455 = vshrl.u32 %v175, 16
      %v457 = vrot.slane %v455, 4
      %v458 = vor.u32 %v457, %v453
      %v459 = vrot.slane %v458, 4
      %v461 = vshll.u32 %v176, 16
      %v463 = vrot.slane %v461, 5
      %v464 = vsel %vm200, %v459, %v463
      %v466 = vshrl.u32 %v177, 16
      %v468 = vrot.slane %v466, 4
      %v469 = vshll.u32 %v177, 16
      %v471 = vrot.slane %v469, 5
      %v472 = vor.u32 %v468, %v471
      %v473 = vrot.slane %v472, 4
      %v475 = vshll.u32 %v178, 16
      %v477 = vrot.slane %v475, 5
      %v478 = vsel %vm200, %v473, %v477
      %v479 = vshrl.u32 %v178, 16
      %v481 = vrot.slane %v479, 4
      %v482 = vor.u32 %v481, %v477
      %v483 = vrot.slane %v482, 4
      %v485 = vshll.u32 %v179, 16
      %v487 = vrot.slane %v485, 5
      %v488 = vsel %vm200, %v483, %v487
      %v490 = vshrl.u32 %v180, 16
      %v492 = vrot.slane %v490, 4
      %v493 = vshll.u32 %v180, 16
      %v495 = vrot.slane %v493, 5
      %v496 = vor.u32 %v492, %v495
      %v497 = vrot.slane %v496, 4
      %v499 = vshll.u32 %v181, 16
      %v501 = vrot.slane %v499, 5
      %v502 = vsel %vm200, %v497, %v501
      %v503 = vshrl.u32 %v181, 16
      %v505 = vrot.slane %v503, 4
      %v506 = vor.u32 %v505, %v501
      %v507 = vrot.slane %v506, 4
      %v509 = vshll.u32 %v182, 16
      %v511 = vrot.slane %v509, 5
      %v512 = vsel %vm200, %v507, %v511
      %v514 = vshrl.u32 %v183, 16
      %v516 = vrot.slane %v514, 4
      %v517 = vshll.u32 %v183, 16
      %v519 = vrot.slane %v517, 5
      %v520 = vor.u32 %v516, %v519
      %v521 = vrot.slane %v520, 4
      %v523 = vshll.u32 %v184, 16
      %v525 = vrot.slane %v523, 5
      %v526 = vsel %vm200, %v521, %v525
      %v527 = vshrl.u32 %v184, 16
      %v529 = vrot.slane %v527, 4
      %v530 = vor.u32 %v529, %v525
      %v531 = vrot.slane %v530, 4
      %v533 = vshll.u32 %v185, 16
      %v535 = vrot.slane %v533, 5
      %v536 = vsel %vm200, %v531, %v535
      %v538 = vshrl.u32 %v186, 16
      %v540 = vrot.slane %v538, 4
      %v541 = vshll.u32 %v186, 16
      %v543 = vrot.slane %v541, 5
      %v544 = vor.u32 %v540, %v543
      %v545 = vrot.slane %v544, 4
      %v547 = vshll.u32 %v187, 16
      %v549 = vrot.slane %v547, 5
      %v550 = vsel %vm200, %v545, %v549
      %v551 = vshrl.u32 %v187, 16
      %v553 = vrot.slane %v551, 4
      %v554 = vor.u32 %v553, %v549
      %v555 = vrot.slane %v554, 4
      %v557 = vshll.u32 %v188, 16
      %v559 = vrot.slane %v557, 5
      %v560 = vsel %vm200, %v555, %v559
      %v562 = vshrl.u32 %v189, 16
      %v564 = vrot.slane %v562, 4
      %v565 = vshll.u32 %v189, 16
      %v567 = vrot.slane %v565, 5
      %v568 = vor.u32 %v564, %v567
      %v569 = vrot.slane %v568, 4
      %v571 = vshll.u32 %v190, 16
      %v573 = vrot.slane %v571, 5
      %v574 = vsel %vm200, %v569, %v573
      %v575 = vshrl.u32 %v190, 16
      %v577 = vrot.slane %v575, 4
      %v578 = vor.u32 %v577, %v573
      %v579 = vrot.slane %v578, 4
      %v581 = vshll.u32 %v191, 16
      %v583 = vrot.slane %v581, 5
      %v584 = vsel %vm200, %v579, %v583
      %vm633 = vcmask 1042432
      %vm634 = vcmask 1046532
      %vm635 = vmor %vm633, %vm634
      %v636 = vrot.slane %v144, 5
      %v637 = vrot.slane %v636, 4
      %v638 = vrot.slane %v145, 5
      %v639 = vsel %vm635, %v637, %v638
      %v640 = vrot.slane %v638, 4
      %v641 = vrot.slane %v146, 5
      %v642 = vsel %vm635, %v640, %v641
      %v643 = vrot.slane %v147, 5
      %v644 = vrot.slane %v643, 4
      %v645 = vrot.slane %v148, 5
      %v646 = vsel %vm635, %v644, %v645
      %v647 = vrot.slane %v645, 4
      %v648 = vrot.slane %v149, 5
      %v649 = vsel %vm635, %v647, %v648
      %v650 = vrot.slane %v150, 5
      %v651 = vrot.slane %v650, 4
      %v652 = vrot.slane %v151, 5
      %v653 = vsel %vm635, %v651, %v652
      %v654 = vrot.slane %v652, 4
      %v655 = vrot.slane %v152, 5
      %v656 = vsel %vm635, %v654, %v655
      %v657 = vrot.slane %v153, 5
      %v658 = vrot.slane %v657, 4
      %v659 = vrot.slane %v154, 5
      %v660 = vsel %vm635, %v658, %v659
      %v661 = vrot.slane %v659, 4
      %v662 = vrot.slane %v155, 5
      %v663 = vsel %vm635, %v661, %v662
      %v664 = vrot.slane %v156, 5
      %v665 = vrot.slane %v664, 4
      %v666 = vrot.slane %v157, 5
      %v667 = vsel %vm635, %v665, %v666
      %v668 = vrot.slane %v666, 4
      %v669 = vrot.slane %v158, 5
      %v670 = vsel %vm635, %v668, %v669
      %v671 = vrot.slane %v159, 5
      %v672 = vrot.slane %v671, 4
      %v673 = vrot.slane %v160, 5
      %v674 = vsel %vm635, %v672, %v673
      %v675 = vrot.slane %v673, 4
      %v676 = vrot.slane %v161, 5
      %v677 = vsel %vm635, %v675, %v676
      %v678 = vrot.slane %v162, 5
      %v679 = vrot.slane %v678, 4
      %v680 = vrot.slane %v163, 5
      %v681 = vsel %vm635, %v679, %v680
      %v682 = vrot.slane %v680, 4
      %v683 = vrot.slane %v164, 5
      %v684 = vsel %vm635, %v682, %v683
      %v685 = vrot.slane %v165, 5
      %v686 = vrot.slane %v685, 4
      %v687 = vrot.slane %v166, 5
      %v688 = vsel %vm635, %v686, %v687
      %v689 = vrot.slane %v687, 4
      %v690 = vrot.slane %v167, 5
      %v691 = vsel %vm635, %v689, %v690
      %v692 = vrot.slane %v168, 5
      %v693 = vrot.slane %v692, 4
      %v694 = vrot.slane %v169, 5
      %v695 = vsel %vm635, %v693, %v694
      %v696 = vrot.slane %v694, 4
      %v697 = vrot.slane %v170, 5
      %v698 = vsel %vm635, %v696, %v697
      %v699 = vrot.slane %v171, 5
      %v700 = vrot.slane %v699, 4
      %v701 = vrot.slane %v172, 5
      %v702 = vsel %vm635, %v700, %v701
      %v703 = vrot.slane %v701, 4
      %v704 = vrot.slane %v173, 5
      %v705 = vsel %vm635, %v703, %v704
      %v706 = vrot.slane %v174, 5
      %v707 = vrot.slane %v706, 4
      %v708 = vrot.slane %v175, 5
      %v709 = vsel %vm635, %v707, %v708
      %v710 = vrot.slane %v708, 4
      %v711 = vrot.slane %v176, 5
      %v712 = vsel %vm635, %v710, %v711
      %v713 = vrot.slane %v177, 5
      %v714 = vrot.slane %v713, 4
      %v715 = vrot.slane %v178, 5
      %v716 = vsel %vm635, %v714, %v715
      %v717 = vrot.slane %v715, 4
      %v718 = vrot.slane %v179, 5
      %v719 = vsel %vm635, %v717, %v718
      %v720 = vrot.slane %v180, 5
      %v721 = vrot.slane %v720, 4
      %v722 = vrot.slane %v181, 5
      %v723 = vsel %vm635, %v721, %v722
      %v724 = vrot.slane %v722, 4
      %v725 = vrot.slane %v182, 5
      %v726 = vsel %vm635, %v724, %v725
      %v727 = vrot.slane %v183, 5
      %v728 = vrot.slane %v727, 4
      %v729 = vrot.slane %v184, 5
      %v730 = vsel %vm635, %v728, %v729
      %v731 = vrot.slane %v729, 4
      %v732 = vrot.slane %v185, 5
      %v733 = vsel %vm635, %v731, %v732
      %v734 = vrot.slane %v186, 5
      %v735 = vrot.slane %v734, 4
      %v736 = vrot.slane %v187, 5
      %v737 = vsel %vm635, %v735, %v736
      %v738 = vrot.slane %v736, 4
      %v739 = vrot.slane %v188, 5
      %v740 = vsel %vm635, %v738, %v739
      %v741 = vrot.slane %v189, 5
      %v742 = vrot.slane %v741, 4
      %v743 = vrot.slane %v190, 5
      %v744 = vsel %vm635, %v742, %v743
      %v745 = vrot.slane %v743, 4
      %v746 = vrot.slane %v191, 5
      %v747 = vsel %vm635, %v745, %v746
      %v749 = vshrl.u32 %v192, 16
      %v751 = vrot.slane %v749, 4
      %v752 = vshll.u32 %v192, 16
      %v754 = vrot.slane %v752, 5
      %v755 = vor.u32 %v751, %v754
      %v756 = vrot.slane %v755, 4
      %v758 = vshll.u32 %v193, 16
      %v760 = vrot.slane %v758, 5
      %v761 = vsel %vm200, %v756, %v760
      %v762 = vshrl.u32 %v193, 16
      %v764 = vrot.slane %v762, 4
      %v765 = vor.u32 %v764, %v760
      %v766 = vrot.slane %v765, 4
      %v768 = vshll.u32 %v194, 16
      %v770 = vrot.slane %v768, 5
      %v771 = vsel %vm200, %v766, %v770
      %v775 = vrot.slane %v192, 5
      %v776 = vrot.slane %v775, 4
      %v777 = vrot.slane %v193, 5
      %v778 = vsel %vm635, %v776, %v777
      %v779 = vrot.slane %v777, 4
      %v780 = vrot.slane %v194, 5
      %v781 = vsel %vm635, %v779, %v780
      %v783 = vshrl.u32 %v195, 16
      %v785 = vrot.slane %v783, 4
      %v786 = vshll.u32 %v195, 16
      %v788 = vrot.slane %v786, 5
      %v789 = vor.u32 %v785, %v788
      %v790 = vrot.slane %v789, 4
      %v792 = vshll.u32 %v196, 16
      %v794 = vrot.slane %v792, 5
      %v795 = vsel %vm200, %v790, %v794
      %v796 = vshrl.u32 %v196, 16
      %v798 = vrot.slane %v796, 4
      %v799 = vor.u32 %v798, %v794
      %v800 = vrot.slane %v799, 4
      %v802 = vshll.u32 %v197, 16
      %v804 = vrot.slane %v802, 5
      %v805 = vsel %vm200, %v800, %v804
      %v809 = vrot.slane %v195, 5
      %v810 = vrot.slane %v809, 4
      %v811 = vrot.slane %v196, 5
      %v812 = vsel %vm635, %v810, %v811
      %v813 = vrot.slane %v811, 4
      %v814 = vrot.slane %v197, 5
      %v815 = vsel %vm635, %v813, %v814
      %v816 = vunpack.c.l.b16 %v144
      %v817 = vunpack.c.l.b16 %v145
      %v818 = vunpack.c.l.b16 %v147
      %v819 = vunpack.c.l.b16 %v148
      %v820 = vunpack.c.l.b16 %v150
      %v821 = vunpack.c.l.b16 %v151
      %v822 = vunpack.c.l.b16 %v153
      %v823 = vunpack.c.l.b16 %v154
      %v824 = vunpack.c.l.b16 %v156
      %v825 = vunpack.c.l.b16 %v157
      %v826 = vunpack.c.l.b16 %v159
      %v827 = vunpack.c.l.b16 %v160
      %v828 = vunpack.c.l.b16 %v162
      %v829 = vunpack.c.l.b16 %v163
      %v830 = vunpack.c.l.b16 %v165
      %v831 = vunpack.c.l.b16 %v166
      %v832 = vunpack.c.l.b16 %v168
      %v833 = vunpack.c.l.b16 %v169
      %v834 = vunpack.c.l.b16 %v171
      %v835 = vunpack.c.l.b16 %v172
      %v836 = vunpack.c.l.b16 %v174
      %v837 = vunpack.c.l.b16 %v175
      %v838 = vunpack.c.l.b16 %v177
      %v839 = vunpack.c.l.b16 %v178
      %v840 = vunpack.c.l.b16 %v180
      %v841 = vunpack.c.l.b16 %v181
      %v842 = vunpack.c.l.b16 %v183
      %v843 = vunpack.c.l.b16 %v184
      %v844 = vunpack.c.l.b16 %v186
      %v845 = vunpack.c.l.b16 %v187
      %v846 = vunpack.c.l.b16 %v189
      %v847 = vunpack.c.l.b16 %v190
      %v848 = vpack.c.b16 %v817, %v816
      %v849 = vpack.c.b16 %v819, %v818
      %v850 = vpack.c.b16 %v821, %v820
      %v851 = vpack.c.b16 %v823, %v822
      %v852 = vpack.c.b16 %v825, %v824
      %v853 = vpack.c.b16 %v827, %v826
      %v854 = vpack.c.b16 %v829, %v828
      %v855 = vpack.c.b16 %v831, %v830
      %v856 = vpack.c.b16 %v833, %v832
      %v857 = vpack.c.b16 %v835, %v834
      %v858 = vpack.c.b16 %v837, %v836
      %v859 = vpack.c.b16 %v839, %v838
      %v860 = vpack.c.b16 %v841, %v840
      %v861 = vpack.c.b16 %v843, %v842
      %v862 = vpack.c.b16 %v845, %v844
      %v863 = vpack.c.b16 %v847, %v846
      %v880 = vunpack.c.l.b16 %v214
      %v881 = vunpack.c.l.b16 %v224
      %v882 = vunpack.c.l.b16 %v238
      %v883 = vunpack.c.l.b16 %v248
      %v884 = vunpack.c.l.b16 %v262
      %v885 = vunpack.c.l.b16 %v272
      %v886 = vunpack.c.l.b16 %v286
      %v887 = vunpack.c.l.b16 %v296
      %v888 = vunpack.c.l.b16 %v310
      %v889 = vunpack.c.l.b16 %v320
      %v890 = vunpack.c.l.b16 %v334
      %v891 = vunpack.c.l.b16 %v344
      %v892 = vunpack.c.l.b16 %v358
      %v893 = vunpack.c.l.b16 %v368
      %v894 = vunpack.c.l.b16 %v382
      %v895 = vunpack.c.l.b16 %v392
      %v896 = vunpack.c.l.b16 %v406
      %v897 = vunpack.c.l.b16 %v416
      %v898 = vunpack.c.l.b16 %v430
      %v899 = vunpack.c.l.b16 %v440
      %v900 = vunpack.c.l.b16 %v454
      %v901 = vunpack.c.l.b16 %v464
      %v902 = vunpack.c.l.b16 %v478
      %v903 = vunpack.c.l.b16 %v488
      %v904 = vunpack.c.l.b16 %v502
      %v905 = vunpack.c.l.b16 %v512
      %v906 = vunpack.c.l.b16 %v526
      %v907 = vunpack.c.l.b16 %v536
      %v908 = vunpack.c.l.b16 %v550
      %v909 = vunpack.c.l.b16 %v560
      %v910 = vunpack.c.l.b16 %v574
      %v911 = vunpack.c.l.b16 %v584
      %v912 = vpack.c.b16 %v881, %v880
      %v913 = vpack.c.b16 %v883, %v882
      %v914 = vpack.c.b16 %v885, %v884
      %v915 = vpack.c.b16 %v887, %v886
      %v916 = vpack.c.b16 %v889, %v888
      %v917 = vpack.c.b16 %v891, %v890
      %v918 = vpack.c.b16 %v893, %v892
      %v919 = vpack.c.b16 %v895, %v894
      %v920 = vpack.c.b16 %v897, %v896
      %v921 = vpack.c.b16 %v899, %v898
      %v922 = vpack.c.b16 %v901, %v900
      %v923 = vpack.c.b16 %v903, %v902
      %v924 = vpack.c.b16 %v905, %v904
      %v925 = vpack.c.b16 %v907, %v906
      %v926 = vpack.c.b16 %v909, %v908
      %v927 = vpack.c.b16 %v911, %v910
      %v944 = vunpack.c.l.b16 %v639
      %v945 = vunpack.c.l.b16 %v642
      %v946 = vunpack.c.l.b16 %v646
      %v947 = vunpack.c.l.b16 %v649
      %v948 = vunpack.c.l.b16 %v653
      %v949 = vunpack.c.l.b16 %v656
      %v950 = vunpack.c.l.b16 %v660
      %v951 = vunpack.c.l.b16 %v663
      %v952 = vunpack.c.l.b16 %v667
      %v953 = vunpack.c.l.b16 %v670
      %v954 = vunpack.c.l.b16 %v674
      %v955 = vunpack.c.l.b16 %v677
      %v956 = vunpack.c.l.b16 %v681
      %v957 = vunpack.c.l.b16 %v684
      %v958 = vunpack.c.l.b16 %v688
      %v959 = vunpack.c.l.b16 %v691
      %v960 = vunpack.c.l.b16 %v695
      %v961 = vunpack.c.l.b16 %v698
      %v962 = vunpack.c.l.b16 %v702
      %v963 = vunpack.c.l.b16 %v705
      %v964 = vunpack.c.l.b16 %v709
      %v965 = vunpack.c.l.b16 %v712
      %v966 = vunpack.c.l.b16 %v716
      %v967 = vunpack.c.l.b16 %v719
      %v968 = vunpack.c.l.b16 %v723
      %v969 = vunpack.c.l.b16 %v726
      %v970 = vunpack.c.l.b16 %v730
      %v971 = vunpack.c.l.b16 %v733
      %v972 = vunpack.c.l.b16 %v737
      %v973 = vunpack.c.l.b16 %v740
      %v974 = vunpack.c.l.b16 %v744
      %v975 = vunpack.c.l.b16 %v747
      %v976 = vpack.c.b16 %v945, %v944
      %v977 = vpack.c.b16 %v947, %v946
      %v978 = vpack.c.b16 %v949, %v948
      %v979 = vpack.c.b16 %v951, %v950
      %v980 = vpack.c.b16 %v953, %v952
      %v981 = vpack.c.b16 %v955, %v954
      %v982 = vpack.c.b16 %v957, %v956
      %v983 = vpack.c.b16 %v959, %v958
      %v984 = vpack.c.b16 %v961, %v960
      %v985 = vpack.c.b16 %v963, %v962
      %v986 = vpack.c.b16 %v965, %v964
      %v987 = vpack.c.b16 %v967, %v966
      %v988 = vpack.c.b16 %v969, %v968
      %v989 = vpack.c.b16 %v971, %v970
      %v990 = vpack.c.b16 %v973, %v972
      %v991 = vpack.c.b16 %v975, %v974
      %v1008 = vunpack.c.l.b16 %v192
      %v1009 = vunpack.c.l.b16 %v193
      %v1010 = vpack.c.b16 %v1009, %v1008
      %v1012 = vunpack.c.l.b16 %v761
      %v1013 = vunpack.c.l.b16 %v771
      %v1014 = vpack.c.b16 %v1013, %v1012
      %v1016 = vunpack.c.l.b16 %v778
      %v1017 = vunpack.c.l.b16 %v781
      %v1018 = vpack.c.b16 %v1017, %v1016
      %v1020 = vunpack.c.l.b16 %v195
      %v1021 = vunpack.c.l.b16 %v196
      %v1022 = vpack.c.b16 %v1021, %v1020
      %v1024 = vunpack.c.l.b16 %v795
      %v1025 = vunpack.c.l.b16 %v805
      %v1026 = vpack.c.b16 %v1025, %v1024
      %v1028 = vunpack.c.l.b16 %v812
      %v1029 = vunpack.c.l.b16 %v815
      %v1030 = vpack.c.b16 %v1029, %v1028
      %v1032 = vld [vmem:[%s1] sm:$0xf]
      %v1033 = vld [vmem:[%s1 + $0x4] sm:$0xf]
      %v1034 = vld [vmem:[%s1 + $0x8] sm:$0xf]
      %v1035 = vld [vmem:[%s1 + $0xc] sm:$0xf]
      %v1036 = vld [vmem:[%s1 + $0x10] sm:$0xf]
      %v1037 = vld [vmem:[%s1 + $0x14] sm:$0xf]
      %v1038 = vld [vmem:[%s1 + $0x18] sm:$0xf]
      %v1039 = vld [vmem:[%s1 + $0x1c] sm:$0xf]
      %v1040 = vld [vmem:[%s1 + $0x20] sm:$0xf]
      %v1041 = vld [vmem:[%s1 + $0x24] sm:$0xf]
      %v1042 = vld [vmem:[%s1 + $0x28] sm:$0xf]
      %v1043 = vld [vmem:[%s1 + $0x2c] sm:$0xf]
      %v1044 = vld [vmem:[%s1 + $0x30] sm:$0xf]
      %v1045 = vld [vmem:[%s1 + $0x34] sm:$0xf]
      %v1046 = vld [vmem:[%s1 + $0x38] sm:$0xf]
      %v1047 = vld [vmem:[%s1 + $0x3c] sm:$0xf]
      %v1048 = vld [vmem:[%s1 + $0x40] sm:$0xf]
      %v1049 = vld [vmem:[%s1 + $0x44] sm:$0xf]
      %v1050 = vld [vmem:[%s1 + $0x48] sm:$0xf]
      %v1051 = vld [vmem:[%s1 + $0x4c] sm:$0xf]
      %v1052 = vld [vmem:[%s1 + $0x50] sm:$0xf]
      %v1053 = vld [vmem:[%s1 + $0x54] sm:$0xf]
      %v1054 = vld [vmem:[%s1 + $0x58] sm:$0xf]
      %v1055 = vld [vmem:[%s1 + $0x5c] sm:$0xf]
      %v1056 = vld [vmem:[%s1 + $0x60] sm:$0xf]
      %v1057 = vld [vmem:[%s1 + $0x64] sm:$0xf]
      %v1058 = vld [vmem:[%s1 + $0x68] sm:$0xf]
      %v1059 = vld [vmem:[%s1 + $0x6c] sm:$0xf]
      %v1060 = vld [vmem:[%s1 + $0x70] sm:$0xf]
      %v1061 = vld [vmem:[%s1 + $0x74] sm:$0xf]
      %v1062 = vld [vmem:[%s1 + $0x78] sm:$0xf]
      %v1063 = vld [vmem:[%s1 + $0x7c] sm:$0xf]
      %v1064 = vld [vmem:[%s1 + $0x80] sm:$0xf]
      %v1065 = vld [vmem:[%s1 + $0x84] sm:$0xf]
      %v1066 = vld [vmem:[%s1 + $0x88] sm:$0xf]
      %v1067 = vld [vmem:[%s1 + $0x8c] sm:$0xf]
      %v1068 = vld [vmem:[%s1 + $0x90] sm:$0xf]
      %v1069 = vld [vmem:[%s1 + $0x94] sm:$0xf]
      %v1070 = vld [vmem:[%s1 + $0x98] sm:$0xf]
      %v1071 = vld [vmem:[%s1 + $0x9c] sm:$0xf]
      %v1072 = vld [vmem:[%s1 + $0xa0] sm:$0xf]
      %v1073 = vld [vmem:[%s1 + $0xa4] sm:$0xf]
      %v1074 = vld [vmem:[%s1 + $0xa8] sm:$0xf]
      %v1075 = vld [vmem:[%s1 + $0xac] sm:$0xf]
      %v1076 = vld [vmem:[%s1 + $0xb0] sm:$0xf]
      %v1077 = vld [vmem:[%s1 + $0xb4] sm:$0xf]
      %v1078 = vld [vmem:[%s1 + $0xb8] sm:$0xf]
      %v1079 = vld [vmem:[%s1 + $0xbc] sm:$0xf]
      %v1080 = vld [vmem:[%s1 + $0xc0] sm:$0xf]
      %v1081 = vld [vmem:[%s1 + $0xc4] sm:$0xf]
      %v1082 = vld [vmem:[%s1 + $0xc8] sm:$0xf]
      %v1083 = vld [vmem:[%s1 + $0xcc] sm:$0xf]
      %v1084 = vld [vmem:[%s1 + $0xd0] sm:$0xf]
      %v1085 = vld [vmem:[%s1 + $0xd4] sm:$0xf]
      %v1086 = vld [vmem:[%s1 + $0xd8] sm:$0xf]
      %v1087 = vld [vmem:[%s1 + $0xdc] sm:$0xf]
      %v1088 = vld [vmem:[%s1 + $0xe0] sm:$0xf]
      %v1089 = vld [vmem:[%s1 + $0xe4] sm:$0xf]
      %v1090 = vld [vmem:[%s1 + $0xe8] sm:$0xf]
      %v1091 = vld [vmem:[%s1 + $0xec] sm:$0xf]
      %v1092 = vld [vmem:[%s1 + $0xf0] sm:$0xf]
      %v1093 = vld [vmem:[%s1 + $0xf4] sm:$0xf]
      %v1094 = vld [vmem:[%s1 + $0xf8] sm:$0xf]
      %v1095 = vld [vmem:[%s1 + $0xfc] sm:$0xf]
      %v1096 = vld [vmem:[%s1 + $0x100] sm:$0xf]
      %v1097 = vld [vmem:[%s1 + $0x104] sm:$0xf]
      %v1098 = vld [vmem:[%s1 + $0x108] sm:$0xf]
      %v1099 = vld [vmem:[%s1 + $0x10c] sm:$0xf]
      %v1100 = vld [vmem:[%s1 + $0x110] sm:$0xf]
      %v1101 = vld [vmem:[%s1 + $0x114] sm:$0xf]
      %v1102 = vld [vmem:[%s1 + $0x118] sm:$0xf]
      %v1103 = vld [vmem:[%s1 + $0x11c] sm:$0xf]
      %v1104 = vld [vmem:[%s1 + $0x120] sm:$0xf]
      %v1105 = vld [vmem:[%s1 + $0x124] sm:$0xf]
      %v1106 = vld [vmem:[%s1 + $0x128] sm:$0xf]
      %v1107 = vld [vmem:[%s1 + $0x12c] sm:$0xf]
      %v1108 = vld [vmem:[%s1 + $0x130] sm:$0xf]
      %v1109 = vld [vmem:[%s1 + $0x134] sm:$0xf]
      %v1110 = vld [vmem:[%s1 + $0x138] sm:$0xf]
      %v1111 = vld [vmem:[%s1 + $0x13c] sm:$0xf]
      %v1112 = vld [vmem:[%s1 + $0x140] sm:$0xf]
      %v1113 = vld [vmem:[%s1 + $0x144] sm:$0xf]
      %v1114 = vld [vmem:[%s1 + $0x148] sm:$0xf]
      %v1115 = vld [vmem:[%s1 + $0x14c] sm:$0xf]
      %v1116 = vld [vmem:[%s1 + $0x150] sm:$0xf]
      %v1117 = vld [vmem:[%s1 + $0x154] sm:$0xf]
      %v1118 = vld [vmem:[%s1 + $0x158] sm:$0xf]
      %v1119 = vld [vmem:[%s1 + $0x15c] sm:$0xf]
      %v1120 = vld [vmem:[%s1 + $0x160] sm:$0xf]
      %v1121 = vld [vmem:[%s1 + $0x164] sm:$0xf]
      %v1122 = vld [vmem:[%s1 + $0x168] sm:$0xf]
      %v1123 = vld [vmem:[%s1 + $0x16c] sm:$0xf]
      %v1124 = vld [vmem:[%s1 + $0x170] sm:$0xf]
      %v1125 = vld [vmem:[%s1 + $0x174] sm:$0xf]
      %v1126 = vld [vmem:[%s1 + $0x178] sm:$0xf]
      %v1127 = vld [vmem:[%s1 + $0x17c] sm:$0xf]
      %v1128 = vld [vmem:[%s1 + $0x180] sm:$0xf]
      %v1129 = vld [vmem:[%s1 + $0x184] sm:$0xf]
      %v1130 = vld [vmem:[%s1 + $0x188] sm:$0xf]
      %v1131 = vld [vmem:[%s1 + $0x18c] sm:$0xf]
      %v1132 = vld [vmem:[%s1 + $0x190] sm:$0xf]
      %v1133 = vld [vmem:[%s1 + $0x194] sm:$0xf]
      %v1134 = vld [vmem:[%s1 + $0x198] sm:$0xf]
      %v1135 = vld [vmem:[%s1 + $0x19c] sm:$0xf]
      %v1136 = vld [vmem:[%s1 + $0x1a0] sm:$0xf]
      %v1137 = vld [vmem:[%s1 + $0x1a4] sm:$0xf]
      %v1138 = vld [vmem:[%s1 + $0x1a8] sm:$0xf]
      %v1139 = vld [vmem:[%s1 + $0x1ac] sm:$0xf]
      %v1140 = vld [vmem:[%s1 + $0x1b0] sm:$0xf]
      %v1141 = vld [vmem:[%s1 + $0x1b4] sm:$0xf]
      %v1142 = vld [vmem:[%s1 + $0x1b8] sm:$0xf]
      %v1143 = vld [vmem:[%s1 + $0x1bc] sm:$0xf]
      %v1144 = vld [vmem:[%s1 + $0x1c0] sm:$0xf]
      %v1145 = vld [vmem:[%s1 + $0x1c4] sm:$0xf]
      %v1146 = vld [vmem:[%s1 + $0x1c8] sm:$0xf]
      %v1147 = vld [vmem:[%s1 + $0x1cc] sm:$0xf]
      %v1148 = vld [vmem:[%s1 + $0x1d0] sm:$0xf]
      %v1149 = vld [vmem:[%s1 + $0x1d4] sm:$0xf]
      %v1150 = vld [vmem:[%s1 + $0x1d8] sm:$0xf]
      %v1151 = vld [vmem:[%s1 + $0x1dc] sm:$0xf]
      %v1152 = vld [vmem:[%s1 + $0x1e0] sm:$0xf]
      %v1153 = vld [vmem:[%s1 + $0x1e4] sm:$0xf]
      %v1154 = vld [vmem:[%s1 + $0x1e8] sm:$0xf]
      %v1155 = vld [vmem:[%s1 + $0x1ec] sm:$0xf]
      %v1156 = vld [vmem:[%s1 + $0x1f0] sm:$0xf]
      %v1157 = vld [vmem:[%s1 + $0x1f4] sm:$0xf]
      %v1158 = vld [vmem:[%s1 + $0x1f8] sm:$0xf]
      %v1159 = vld [vmem:[%s1 + $0x1fc] sm:$0xf]
      %v1160 = vld [vmem:[%s1 + $0x200] sm:$0xf]
      %v1161 = vld [vmem:[%s1 + $0x204] sm:$0xf]
      %v1162 = vld [vmem:[%s1 + $0x208] sm:$0xf]
      %v1163 = vld [vmem:[%s1 + $0x20c] sm:$0xf]
      %v1164 = vld [vmem:[%s1 + $0x210] sm:$0xf]
      %v1165 = vld [vmem:[%s1 + $0x214] sm:$0xf]
      %v1166 = vld [vmem:[%s1 + $0x218] sm:$0xf]
      %v1167 = vld [vmem:[%s1 + $0x21c] sm:$0xf]
      %v1168 = vld [vmem:[%s1 + $0x220] sm:$0xf]
      %v1169 = vld [vmem:[%s1 + $0x224] sm:$0xf]
      %v1170 = vld [vmem:[%s1 + $0x228] sm:$0xf]
      %v1171 = vld [vmem:[%s1 + $0x22c] sm:$0xf]
      %v1172 = vld [vmem:[%s1 + $0x230] sm:$0xf]
      %v1173 = vld [vmem:[%s1 + $0x234] sm:$0xf]
      %v1174 = vld [vmem:[%s1 + $0x238] sm:$0xf]
      %v1175 = vld [vmem:[%s1 + $0x23c] sm:$0xf]
      %v1320 = vunpack.c.l.b16 %v1032
      %v1321 = vunpack.c.l.b16 %v1033
      %v1322 = vunpack.c.l.b16 %v1034
      %v1323 = vunpack.c.l.b16 %v1035
      %v1324 = vunpack.c.l.b16 %v1036
      %v1325 = vunpack.c.l.b16 %v1037
      %v1326 = vunpack.c.l.b16 %v1038
      %v1327 = vunpack.c.l.b16 %v1039
      %v1328 = vunpack.c.l.b16 %v1040
      %v1329 = vunpack.c.l.b16 %v1041
      %v1330 = vunpack.c.l.b16 %v1042
      %v1331 = vunpack.c.l.b16 %v1043
      %v1332 = vunpack.c.l.b16 %v1044
      %v1333 = vunpack.c.l.b16 %v1045
      %v1334 = vunpack.c.l.b16 %v1046
      %v1335 = vunpack.c.l.b16 %v1047
      %v1336 = vunpack.c.l.b16 %v1048
      %v1337 = vunpack.c.l.b16 %v1049
      %v1338 = vunpack.c.l.b16 %v1050
      %v1339 = vunpack.c.l.b16 %v1051
      %v1340 = vunpack.c.l.b16 %v1052
      %v1341 = vunpack.c.l.b16 %v1053
      %v1342 = vunpack.c.l.b16 %v1054
      %v1343 = vunpack.c.l.b16 %v1055
      %v1344 = vunpack.c.l.b16 %v1056
      %v1345 = vunpack.c.l.b16 %v1057
      %v1346 = vunpack.c.l.b16 %v1058
      %v1347 = vunpack.c.l.b16 %v1059
      %v1348 = vunpack.c.l.b16 %v1060
      %v1349 = vunpack.c.l.b16 %v1061
      %v1350 = vunpack.c.l.b16 %v1062
      %v1351 = vunpack.c.l.b16 %v1063
      %v1352 = vunpack.c.l.b16 %v1064
      %v1353 = vunpack.c.l.b16 %v1065
      %v1354 = vunpack.c.l.b16 %v1066
      %v1355 = vunpack.c.l.b16 %v1067
      %v1356 = vunpack.c.l.b16 %v1068
      %v1357 = vunpack.c.l.b16 %v1069
      %v1358 = vunpack.c.l.b16 %v1070
      %v1359 = vunpack.c.l.b16 %v1071
      %v1360 = vunpack.c.l.b16 %v1072
      %v1361 = vunpack.c.l.b16 %v1073
      %v1362 = vunpack.c.l.b16 %v1074
      %v1363 = vunpack.c.l.b16 %v1075
      %v1364 = vunpack.c.l.b16 %v1076
      %v1365 = vunpack.c.l.b16 %v1077
      %v1366 = vunpack.c.l.b16 %v1078
      %v1367 = vunpack.c.l.b16 %v1079
      %v1368 = vunpack.c.l.b16 %v1080
      %v1369 = vunpack.c.l.b16 %v1081
      %v1370 = vunpack.c.l.b16 %v1082
      %v1371 = vunpack.c.l.b16 %v1083
      %v1372 = vunpack.c.l.b16 %v1084
      %v1373 = vunpack.c.l.b16 %v1085
      %v1374 = vunpack.c.l.b16 %v1086
      %v1375 = vunpack.c.l.b16 %v1087
      %v1376 = vunpack.c.l.b16 %v1088
      %v1377 = vunpack.c.l.b16 %v1089
      %v1378 = vunpack.c.l.b16 %v1090
      %v1379 = vunpack.c.l.b16 %v1091
      %v1380 = vunpack.c.l.b16 %v1092
      %v1381 = vunpack.c.l.b16 %v1093
      %v1382 = vunpack.c.l.b16 %v1094
      %v1383 = vunpack.c.l.b16 %v1095
      %v1384 = vunpack.c.l.b16 %v1096
      %v1385 = vunpack.c.l.b16 %v1097
      %v1386 = vunpack.c.l.b16 %v1098
      %v1387 = vunpack.c.l.b16 %v1099
      %v1388 = vunpack.c.l.b16 %v1100
      %v1389 = vunpack.c.l.b16 %v1101
      %v1390 = vunpack.c.l.b16 %v1102
      %v1391 = vunpack.c.l.b16 %v1103
      %v1392 = vunpack.c.l.b16 %v1104
      %v1393 = vunpack.c.l.b16 %v1105
      %v1394 = vunpack.c.l.b16 %v1106
      %v1395 = vunpack.c.l.b16 %v1107
      %v1396 = vunpack.c.l.b16 %v1108
      %v1397 = vunpack.c.l.b16 %v1109
      %v1398 = vunpack.c.l.b16 %v1110
      %v1399 = vunpack.c.l.b16 %v1111
      %v1400 = vunpack.c.l.b16 %v1112
      %v1401 = vunpack.c.l.b16 %v1113
      %v1402 = vunpack.c.l.b16 %v1114
      %v1403 = vunpack.c.l.b16 %v1115
      %v1404 = vunpack.c.l.b16 %v1116
      %v1405 = vunpack.c.l.b16 %v1117
      %v1406 = vunpack.c.l.b16 %v1118
      %v1407 = vunpack.c.l.b16 %v1119
      %v1408 = vunpack.c.l.b16 %v1120
      %v1409 = vunpack.c.l.b16 %v1121
      %v1410 = vunpack.c.l.b16 %v1122
      %v1411 = vunpack.c.l.b16 %v1123
      %v1412 = vunpack.c.l.b16 %v1124
      %v1413 = vunpack.c.l.b16 %v1125
      %v1414 = vunpack.c.l.b16 %v1126
      %v1415 = vunpack.c.l.b16 %v1127
      %v1416 = vunpack.c.l.b16 %v1128
      %v1417 = vunpack.c.l.b16 %v1129
      %v1418 = vunpack.c.l.b16 %v1130
      %v1419 = vunpack.c.l.b16 %v1131
      %v1420 = vunpack.c.l.b16 %v1132
      %v1421 = vunpack.c.l.b16 %v1133
      %v1422 = vunpack.c.l.b16 %v1134
      %v1423 = vunpack.c.l.b16 %v1135
      %v1424 = vunpack.c.l.b16 %v1136
      %v1425 = vunpack.c.l.b16 %v1137
      %v1426 = vunpack.c.l.b16 %v1138
      %v1427 = vunpack.c.l.b16 %v1139
      %v1428 = vunpack.c.l.b16 %v1140
      %v1429 = vunpack.c.l.b16 %v1141
      %v1430 = vunpack.c.l.b16 %v1142
      %v1431 = vunpack.c.l.b16 %v1143
      %v1432 = vunpack.c.l.b16 %v1144
      %v1433 = vunpack.c.l.b16 %v1145
      %v1434 = vunpack.c.l.b16 %v1146
      %v1435 = vunpack.c.l.b16 %v1147
      %v1436 = vunpack.c.l.b16 %v1148
      %v1437 = vunpack.c.l.b16 %v1149
      %v1438 = vunpack.c.l.b16 %v1150
      %v1439 = vunpack.c.l.b16 %v1151
      %v1440 = vunpack.c.l.b16 %v1152
      %v1441 = vunpack.c.l.b16 %v1153
      %v1442 = vunpack.c.l.b16 %v1154
      %v1443 = vunpack.c.l.b16 %v1155
      %v1444 = vunpack.c.l.b16 %v1156
      %v1445 = vunpack.c.l.b16 %v1157
      %v1446 = vunpack.c.l.b16 %v1158
      %v1447 = vunpack.c.l.b16 %v1159
      %v1448 = vunpack.c.l.b16 %v1160
      %v1449 = vunpack.c.l.b16 %v1161
      %v1450 = vunpack.c.l.b16 %v1162
      %v1451 = vunpack.c.l.b16 %v1163
      %v1452 = vunpack.c.l.b16 %v1164
      %v1453 = vunpack.c.l.b16 %v1165
      %v1454 = vunpack.c.l.b16 %v1166
      %v1455 = vunpack.c.l.b16 %v1167
      %v1456 = vunpack.c.l.b16 %v1168
      %v1457 = vunpack.c.l.b16 %v1169
      %v1458 = vunpack.c.l.b16 %v1170
      %v1459 = vunpack.c.l.b16 %v1171
      %v1460 = vunpack.c.l.b16 %v1172
      %v1461 = vunpack.c.l.b16 %v1173
      %v1462 = vunpack.c.l.b16 %v1174
      %v1463 = vunpack.c.l.b16 %v1175
      %v1464 = vpack.c.b16 %v1321, %v1320
      %v1465 = vpack.c.b16 %v1323, %v1322
      %v1466 = vpack.c.b16 %v1325, %v1324
      %v1467 = vpack.c.b16 %v1327, %v1326
      %v1468 = vpack.c.b16 %v1329, %v1328
      %v1469 = vpack.c.b16 %v1331, %v1330
      %v1470 = vpack.c.b16 %v1333, %v1332
      %v1471 = vpack.c.b16 %v1335, %v1334
      %v1472 = vpack.c.b16 %v1337, %v1336
      %v1473 = vpack.c.b16 %v1339, %v1338
      %v1474 = vpack.c.b16 %v1341, %v1340
      %v1475 = vpack.c.b16 %v1343, %v1342
      %v1476 = vpack.c.b16 %v1345, %v1344
      %v1477 = vpack.c.b16 %v1347, %v1346
      %v1478 = vpack.c.b16 %v1349, %v1348
      %v1479 = vpack.c.b16 %v1351, %v1350
      %v1480 = vpack.c.b16 %v1353, %v1352
      %v1481 = vpack.c.b16 %v1355, %v1354
      %v1482 = vpack.c.b16 %v1357, %v1356
      %v1483 = vpack.c.b16 %v1359, %v1358
      %v1484 = vpack.c.b16 %v1361, %v1360
      %v1485 = vpack.c.b16 %v1363, %v1362
      %v1486 = vpack.c.b16 %v1365, %v1364
      %v1487 = vpack.c.b16 %v1367, %v1366
      %v1488 = vpack.c.b16 %v1369, %v1368
      %v1489 = vpack.c.b16 %v1371, %v1370
      %v1490 = vpack.c.b16 %v1373, %v1372
      %v1491 = vpack.c.b16 %v1375, %v1374
      %v1492 = vpack.c.b16 %v1377, %v1376
      %v1493 = vpack.c.b16 %v1379, %v1378
      %v1494 = vpack.c.b16 %v1381, %v1380
      %v1495 = vpack.c.b16 %v1383, %v1382
      %v1496 = vpack.c.b16 %v1385, %v1384
      %v1497 = vpack.c.b16 %v1387, %v1386
      %v1498 = vpack.c.b16 %v1389, %v1388
      %v1499 = vpack.c.b16 %v1391, %v1390
      %v1500 = vpack.c.b16 %v1393, %v1392
      %v1501 = vpack.c.b16 %v1395, %v1394
      %v1502 = vpack.c.b16 %v1397, %v1396
      %v1503 = vpack.c.b16 %v1399, %v1398
      %v1504 = vpack.c.b16 %v1401, %v1400
      %v1505 = vpack.c.b16 %v1403, %v1402
      %v1506 = vpack.c.b16 %v1405, %v1404
      %v1507 = vpack.c.b16 %v1407, %v1406
      %v1508 = vpack.c.b16 %v1409, %v1408
      %v1509 = vpack.c.b16 %v1411, %v1410
      %v1510 = vpack.c.b16 %v1413, %v1412
      %v1511 = vpack.c.b16 %v1415, %v1414
      %v1512 = vpack.c.b16 %v1417, %v1416
      %v1513 = vpack.c.b16 %v1419, %v1418
      %v1514 = vpack.c.b16 %v1421, %v1420
      %v1515 = vpack.c.b16 %v1423, %v1422
      %v1516 = vpack.c.b16 %v1425, %v1424
      %v1517 = vpack.c.b16 %v1427, %v1426
      %v1518 = vpack.c.b16 %v1429, %v1428
      %v1519 = vpack.c.b16 %v1431, %v1430
      %v1520 = vpack.c.b16 %v1433, %v1432
      %v1521 = vpack.c.b16 %v1435, %v1434
      %v1522 = vpack.c.b16 %v1437, %v1436
      %v1523 = vpack.c.b16 %v1439, %v1438
      %v1524 = vpack.c.b16 %v1441, %v1440
      %v1525 = vpack.c.b16 %v1443, %v1442
      %v1526 = vpack.c.b16 %v1445, %v1444
      %v1527 = vpack.c.b16 %v1447, %v1446
      %v1528 = vpack.c.b16 %v1449, %v1448
      %v1529 = vpack.c.b16 %v1451, %v1450
      %v1530 = vpack.c.b16 %v1453, %v1452
      %v1531 = vpack.c.b16 %v1455, %v1454
      %v1532 = vpack.c.b16 %v1457, %v1456
      %v1533 = vpack.c.b16 %v1459, %v1458
      %v1534 = vpack.c.b16 %v1461, %v1460
      %v1535 = vpack.c.b16 %v1463, %v1462
      %1608 = vmatpush.bf16.msra.mxu0 %v1471
      %1609 = vmatpush.bf16.msra.mxu0 %v1470
      %1610 = vmatpush.bf16.msra.mxu0 %v1469
      %1611 = vmatpush.bf16.msra.mxu0 %v1468
      %1612 = vmatpush.bf16.msra.mxu0 %v1467
      %1613 = vmatpush.bf16.msra.mxu0 %v1466
      %1614 = vmatpush.bf16.msra.mxu0 %v1465
      %1615 = vmatpush.bf16.msra.mxu0 %v1464
      %1616 = vmatmul.bf16.gmra.mxu0 %v848
      %v1617 = vpop.f32.mrf.mxu0
      %v1618 = vadd.f32 0.0, %v1617
      %v1619 = vpop.f32.mrf.mxu0
      %v1620 = vadd.f32 0.0, %v1619
      %1621 = vmatmul.bf16.gmra.mxu0 %v849
      %v1622 = vpop.f32.mrf.mxu0
      %v1623 = vadd.f32 0.0, %v1622
      %v1624 = vpop.f32.mrf.mxu0
      %v1625 = vadd.f32 0.0, %v1624
      %1626 = vmatmul.bf16.gmra.mxu0 %v850
      %v1627 = vpop.f32.mrf.mxu0
      %v1628 = vadd.f32 0.0, %v1627
      %v1629 = vpop.f32.mrf.mxu0
      %v1630 = vadd.f32 0.0, %v1629
      %1631 = vmatmul.bf16.gmra.mxu0 %v851
      %v1632 = vpop.f32.mrf.mxu0
      %v1633 = vadd.f32 0.0, %v1632
      %v1634 = vpop.f32.mrf.mxu0
      %v1635 = vadd.f32 0.0, %v1634
      %1636 = vmatmul.bf16.gmra.mxu0 %v852
      %v1637 = vpop.f32.mrf.mxu0
      %v1638 = vadd.f32 0.0, %v1637
      %v1639 = vpop.f32.mrf.mxu0
      %v1640 = vadd.f32 0.0, %v1639
      %1641 = vmatmul.bf16.gmra.mxu0 %v853
      %v1642 = vpop.f32.mrf.mxu0
      %v1643 = vadd.f32 0.0, %v1642
      %v1644 = vpop.f32.mrf.mxu0
      %v1645 = vadd.f32 0.0, %v1644
      %1646 = vmatmul.bf16.gmra.mxu0 %v854
      %v1647 = vpop.f32.mrf.mxu0
      %v1648 = vadd.f32 0.0, %v1647
      %v1649 = vpop.f32.mrf.mxu0
      %v1650 = vadd.f32 0.0, %v1649
      %1651 = vmatmul.bf16.gmra.mxu0 %v855
      %v1652 = vpop.f32.mrf.mxu0
      %v1653 = vadd.f32 0.0, %v1652
      %v1654 = vpop.f32.mrf.mxu0
      %v1655 = vadd.f32 0.0, %v1654
      %1656 = vmatmul.bf16.gmra.mxu0 %v856
      %v1657 = vpop.f32.mrf.mxu0
      %v1658 = vadd.f32 0.0, %v1657
      %v1659 = vpop.f32.mrf.mxu0
      %v1660 = vadd.f32 0.0, %v1659
      %1661 = vmatmul.bf16.gmra.mxu0 %v857
      %v1662 = vpop.f32.mrf.mxu0
      %v1663 = vadd.f32 0.0, %v1662
      %v1664 = vpop.f32.mrf.mxu0
      %v1665 = vadd.f32 0.0, %v1664
      %1666 = vmatmul.bf16.gmra.mxu0 %v858
      %v1667 = vpop.f32.mrf.mxu0
      %v1668 = vadd.f32 0.0, %v1667
      %v1669 = vpop.f32.mrf.mxu0
      %v1670 = vadd.f32 0.0, %v1669
      %1671 = vmatmul.bf16.gmra.mxu0 %v859
      %v1672 = vpop.f32.mrf.mxu0
      %v1673 = vadd.f32 0.0, %v1672
      %v1674 = vpop.f32.mrf.mxu0
      %v1675 = vadd.f32 0.0, %v1674
      %1676 = vmatmul.bf16.gmra.mxu0 %v860
      %v1677 = vpop.f32.mrf.mxu0
      %v1678 = vadd.f32 0.0, %v1677
      %v1679 = vpop.f32.mrf.mxu0
      %v1680 = vadd.f32 0.0, %v1679
      %1681 = vmatmul.bf16.gmra.mxu0 %v861
      %v1682 = vpop.f32.mrf.mxu0
      %v1683 = vadd.f32 0.0, %v1682
      %v1684 = vpop.f32.mrf.mxu0
      %v1685 = vadd.f32 0.0, %v1684
      %1686 = vmatmul.bf16.gmra.mxu0 %v862
      %v1687 = vpop.f32.mrf.mxu0
      %v1688 = vadd.f32 0.0, %v1687
      %v1689 = vpop.f32.mrf.mxu0
      %v1690 = vadd.f32 0.0, %v1689
      %1691 = vmatmul.bf16.gmra.mxu0 %v863
      %v1692 = vpop.f32.mrf.mxu0
      %v1693 = vadd.f32 0.0, %v1692
      %v1694 = vpop.f32.mrf.mxu0
      %v1695 = vadd.f32 0.0, %v1694
      %1696 = vdwg.mxu0
      %1697 = vmatpush.bf16.msra.mxu0 %v1479
      %1698 = vmatpush.bf16.msra.mxu0 %v1478
      %1699 = vmatpush.bf16.msra.mxu0 %v1477
      %1700 = vmatpush.bf16.msra.mxu0 %v1476
      %1701 = vmatpush.bf16.msra.mxu0 %v1475
      %1702 = vmatpush.bf16.msra.mxu0 %v1474
      %1703 = vmatpush.bf16.msra.mxu0 %v1473
      %1704 = vmatpush.bf16.msra.mxu0 %v1472
      %1705 = vmatmul.bf16.gmra.mxu0 %v912
      %v1706 = vpop.f32.mrf.mxu0
      %v1707 = vadd.f32 %v1618, %v1706
      %v1708 = vpop.f32.mrf.mxu0
      %v1709 = vadd.f32 %v1620, %v1708
      %1710 = vmatmul.bf16.gmra.mxu0 %v913
      %v1711 = vpop.f32.mrf.mxu0
      %v1712 = vadd.f32 %v1623, %v1711
      %v1713 = vpop.f32.mrf.mxu0
      %v1714 = vadd.f32 %v1625, %v1713
      %1715 = vmatmul.bf16.gmra.mxu0 %v914
      %v1716 = vpop.f32.mrf.mxu0
      %v1717 = vadd.f32 %v1628, %v1716
      %v1718 = vpop.f32.mrf.mxu0
      %v1719 = vadd.f32 %v1630, %v1718
      %1720 = vmatmul.bf16.gmra.mxu0 %v915
      %v1721 = vpop.f32.mrf.mxu0
      %v1722 = vadd.f32 %v1633, %v1721
      %v1723 = vpop.f32.mrf.mxu0
      %v1724 = vadd.f32 %v1635, %v1723
      %1725 = vmatmul.bf16.gmra.mxu0 %v916
      %v1726 = vpop.f32.mrf.mxu0
      %v1727 = vadd.f32 %v1638, %v1726
      %v1728 = vpop.f32.mrf.mxu0
      %v1729 = vadd.f32 %v1640, %v1728
      %1730 = vmatmul.bf16.gmra.mxu0 %v917
      %v1731 = vpop.f32.mrf.mxu0
      %v1732 = vadd.f32 %v1643, %v1731
      %v1733 = vpop.f32.mrf.mxu0
      %v1734 = vadd.f32 %v1645, %v1733
      %1735 = vmatmul.bf16.gmra.mxu0 %v918
      %v1736 = vpop.f32.mrf.mxu0
      %v1737 = vadd.f32 %v1648, %v1736
      %v1738 = vpop.f32.mrf.mxu0
      %v1739 = vadd.f32 %v1650, %v1738
      %1740 = vmatmul.bf16.gmra.mxu0 %v919
      %v1741 = vpop.f32.mrf.mxu0
      %v1742 = vadd.f32 %v1653, %v1741
      %v1743 = vpop.f32.mrf.mxu0
      %v1744 = vadd.f32 %v1655, %v1743
      %1745 = vmatmul.bf16.gmra.mxu0 %v920
      %v1746 = vpop.f32.mrf.mxu0
      %v1747 = vadd.f32 %v1658, %v1746
      %v1748 = vpop.f32.mrf.mxu0
      %v1749 = vadd.f32 %v1660, %v1748
      %1750 = vmatmul.bf16.gmra.mxu0 %v921
      %v1751 = vpop.f32.mrf.mxu0
      %v1752 = vadd.f32 %v1663, %v1751
      %v1753 = vpop.f32.mrf.mxu0
      %v1754 = vadd.f32 %v1665, %v1753
      %1755 = vmatmul.bf16.gmra.mxu0 %v922
      %v1756 = vpop.f32.mrf.mxu0
      %v1757 = vadd.f32 %v1668, %v1756
      %v1758 = vpop.f32.mrf.mxu0
      %v1759 = vadd.f32 %v1670, %v1758
      %1760 = vmatmul.bf16.gmra.mxu0 %v923
      %v1761 = vpop.f32.mrf.mxu0
      %v1762 = vadd.f32 %v1673, %v1761
      %v1763 = vpop.f32.mrf.mxu0
      %v1764 = vadd.f32 %v1675, %v1763
      %1765 = vmatmul.bf16.gmra.mxu0 %v924
      %v1766 = vpop.f32.mrf.mxu0
      %v1767 = vadd.f32 %v1678, %v1766
      %v1768 = vpop.f32.mrf.mxu0
      %v1769 = vadd.f32 %v1680, %v1768
      %1770 = vmatmul.bf16.gmra.mxu0 %v925
      %v1771 = vpop.f32.mrf.mxu0
      %v1772 = vadd.f32 %v1683, %v1771
      %v1773 = vpop.f32.mrf.mxu0
      %v1774 = vadd.f32 %v1685, %v1773
      %1775 = vmatmul.bf16.gmra.mxu0 %v926
      %v1776 = vpop.f32.mrf.mxu0
      %v1777 = vadd.f32 %v1688, %v1776
      %v1778 = vpop.f32.mrf.mxu0
      %v1779 = vadd.f32 %v1690, %v1778
      %1780 = vmatmul.bf16.gmra.mxu0 %v927
      %v1781 = vpop.f32.mrf.mxu0
      %v1782 = vadd.f32 %v1693, %v1781
      %v1783 = vpop.f32.mrf.mxu0
      %v1784 = vadd.f32 %v1695, %v1783
      %1785 = vdwg.mxu0
      %1786 = vmatpush.bf16.msra.mxu0 %v1487
      %1787 = vmatpush.bf16.msra.mxu0 %v1486
      %1788 = vmatpush.bf16.msra.mxu0 %v1485
      %1789 = vmatpush.bf16.msra.mxu0 %v1484
      %1790 = vmatpush.bf16.msra.mxu0 %v1483
      %1791 = vmatpush.bf16.msra.mxu0 %v1482
      %1792 = vmatpush.bf16.msra.mxu0 %v1481
      %1793 = vmatpush.bf16.msra.mxu0 %v1480
      %1794 = vmatmul.bf16.gmra.mxu0 %v976
      %v1795 = vpop.f32.mrf.mxu0
      %v1796 = vadd.f32 %v1707, %v1795
      %v1797 = vpop.f32.mrf.mxu0
      %v1798 = vadd.f32 %v1709, %v1797
      %1799 = vmatmul.bf16.gmra.mxu0 %v977
      %v1800 = vpop.f32.mrf.mxu0
      %v1801 = vadd.f32 %v1712, %v1800
      %v1802 = vpop.f32.mrf.mxu0
      %v1803 = vadd.f32 %v1714, %v1802
      %1804 = vmatmul.bf16.gmra.mxu0 %v978
      %v1805 = vpop.f32.mrf.mxu0
      %v1806 = vadd.f32 %v1717, %v1805
      %v1807 = vpop.f32.mrf.mxu0
      %v1808 = vadd.f32 %v1719, %v1807
      %1809 = vmatmul.bf16.gmra.mxu0 %v979
      %v1810 = vpop.f32.mrf.mxu0
      %v1811 = vadd.f32 %v1722, %v1810
      %v1812 = vpop.f32.mrf.mxu0
      %v1813 = vadd.f32 %v1724, %v1812
      %1814 = vmatmul.bf16.gmra.mxu0 %v980
      %v1815 = vpop.f32.mrf.mxu0
      %v1816 = vadd.f32 %v1727, %v1815
      %v1817 = vpop.f32.mrf.mxu0
      %v1818 = vadd.f32 %v1729, %v1817
      %1819 = vmatmul.bf16.gmra.mxu0 %v981
      %v1820 = vpop.f32.mrf.mxu0
      %v1821 = vadd.f32 %v1732, %v1820
      %v1822 = vpop.f32.mrf.mxu0
      %v1823 = vadd.f32 %v1734, %v1822
      %1824 = vmatmul.bf16.gmra.mxu0 %v982
      %v1825 = vpop.f32.mrf.mxu0
      %v1826 = vadd.f32 %v1737, %v1825
      %v1827 = vpop.f32.mrf.mxu0
      %v1828 = vadd.f32 %v1739, %v1827
      %1829 = vmatmul.bf16.gmra.mxu0 %v983
      %v1830 = vpop.f32.mrf.mxu0
      %v1831 = vadd.f32 %v1742, %v1830
      %v1832 = vpop.f32.mrf.mxu0
      %v1833 = vadd.f32 %v1744, %v1832
      %1834 = vmatmul.bf16.gmra.mxu0 %v984
      %v1835 = vpop.f32.mrf.mxu0
      %v1836 = vadd.f32 %v1747, %v1835
      %v1837 = vpop.f32.mrf.mxu0
      %v1838 = vadd.f32 %v1749, %v1837
      %1839 = vmatmul.bf16.gmra.mxu0 %v985
      %v1840 = vpop.f32.mrf.mxu0
      %v1841 = vadd.f32 %v1752, %v1840
      %v1842 = vpop.f32.mrf.mxu0
      %v1843 = vadd.f32 %v1754, %v1842
      %1844 = vmatmul.bf16.gmra.mxu0 %v986
      %v1845 = vpop.f32.mrf.mxu0
      %v1846 = vadd.f32 %v1757, %v1845
      %v1847 = vpop.f32.mrf.mxu0
      %v1848 = vadd.f32 %v1759, %v1847
      %1849 = vmatmul.bf16.gmra.mxu0 %v987
      %v1850 = vpop.f32.mrf.mxu0
      %v1851 = vadd.f32 %v1762, %v1850
      %v1852 = vpop.f32.mrf.mxu0
      %v1853 = vadd.f32 %v1764, %v1852
      %1854 = vmatmul.bf16.gmra.mxu0 %v988
      %v1855 = vpop.f32.mrf.mxu0
      %v1856 = vadd.f32 %v1767, %v1855
      %v1857 = vpop.f32.mrf.mxu0
      %v1858 = vadd.f32 %v1769, %v1857
      %1859 = vmatmul.bf16.gmra.mxu0 %v989
      %v1860 = vpop.f32.mrf.mxu0
      %v1861 = vadd.f32 %v1772, %v1860
      %v1862 = vpop.f32.mrf.mxu0
      %v1863 = vadd.f32 %v1774, %v1862
      %1864 = vmatmul.bf16.gmra.mxu0 %v990
      %v1865 = vpop.f32.mrf.mxu0
      %v1866 = vadd.f32 %v1777, %v1865
      %v1867 = vpop.f32.mrf.mxu0
      %v1868 = vadd.f32 %v1779, %v1867
      %1869 = vmatmul.bf16.gmra.mxu0 %v991
      %v1870 = vpop.f32.mrf.mxu0
      %v1871 = vadd.f32 %v1782, %v1870
      %v1872 = vpop.f32.mrf.mxu0
      %v1873 = vadd.f32 %v1784, %v1872
      %1874 = vdwg.mxu0
      %1875 = vmatpush.bf16.msra.mxu0 %v1495
      %1876 = vmatpush.bf16.msra.mxu0 %v1494
      %1877 = vmatpush.bf16.msra.mxu0 %v1493
      %1878 = vmatpush.bf16.msra.mxu0 %v1492
      %1879 = vmatpush.bf16.msra.mxu0 %v1491
      %1880 = vmatpush.bf16.msra.mxu0 %v1490
      %1881 = vmatpush.bf16.msra.mxu0 %v1489
      %1882 = vmatpush.bf16.msra.mxu0 %v1488
      %1883 = vmatmul.bf16.gmra.mxu0 %v849
      %v1884 = vpop.f32.mrf.mxu0
      %v1885 = vadd.f32 %v1796, %v1884
      %v1886 = vpop.f32.mrf.mxu0
      %v1887 = vadd.f32 %v1798, %v1886
      %1888 = vmatmul.bf16.gmra.mxu0 %v850
      %v1889 = vpop.f32.mrf.mxu0
      %v1890 = vadd.f32 %v1801, %v1889
      %v1891 = vpop.f32.mrf.mxu0
      %v1892 = vadd.f32 %v1803, %v1891
      %1893 = vmatmul.bf16.gmra.mxu0 %v851
      %v1894 = vpop.f32.mrf.mxu0
      %v1895 = vadd.f32 %v1806, %v1894
      %v1896 = vpop.f32.mrf.mxu0
      %v1897 = vadd.f32 %v1808, %v1896
      %1898 = vmatmul.bf16.gmra.mxu0 %v852
      %v1899 = vpop.f32.mrf.mxu0
      %v1900 = vadd.f32 %v1811, %v1899
      %v1901 = vpop.f32.mrf.mxu0
      %v1902 = vadd.f32 %v1813, %v1901
      %1903 = vmatmul.bf16.gmra.mxu0 %v853
      %v1904 = vpop.f32.mrf.mxu0
      %v1905 = vadd.f32 %v1816, %v1904
      %v1906 = vpop.f32.mrf.mxu0
      %v1907 = vadd.f32 %v1818, %v1906
      %1908 = vmatmul.bf16.gmra.mxu0 %v854
      %v1909 = vpop.f32.mrf.mxu0
      %v1910 = vadd.f32 %v1821, %v1909
      %v1911 = vpop.f32.mrf.mxu0
      %v1912 = vadd.f32 %v1823, %v1911
      %1913 = vmatmul.bf16.gmra.mxu0 %v855
      %v1914 = vpop.f32.mrf.mxu0
      %v1915 = vadd.f32 %v1826, %v1914
      %v1916 = vpop.f32.mrf.mxu0
      %v1917 = vadd.f32 %v1828, %v1916
      %1918 = vmatmul.bf16.gmra.mxu0 %v856
      %v1919 = vpop.f32.mrf.mxu0
      %v1920 = vadd.f32 %v1831, %v1919
      %v1921 = vpop.f32.mrf.mxu0
      %v1922 = vadd.f32 %v1833, %v1921
      %1923 = vmatmul.bf16.gmra.mxu0 %v857
      %v1924 = vpop.f32.mrf.mxu0
      %v1925 = vadd.f32 %v1836, %v1924
      %v1926 = vpop.f32.mrf.mxu0
      %v1927 = vadd.f32 %v1838, %v1926
      %1928 = vmatmul.bf16.gmra.mxu0 %v858
      %v1929 = vpop.f32.mrf.mxu0
      %v1930 = vadd.f32 %v1841, %v1929
      %v1931 = vpop.f32.mrf.mxu0
      %v1932 = vadd.f32 %v1843, %v1931
      %1933 = vmatmul.bf16.gmra.mxu0 %v859
      %v1934 = vpop.f32.mrf.mxu0
      %v1935 = vadd.f32 %v1846, %v1934
      %v1936 = vpop.f32.mrf.mxu0
      %v1937 = vadd.f32 %v1848, %v1936
      %1938 = vmatmul.bf16.gmra.mxu0 %v860
      %v1939 = vpop.f32.mrf.mxu0
      %v1940 = vadd.f32 %v1851, %v1939
      %v1941 = vpop.f32.mrf.mxu0
      %v1942 = vadd.f32 %v1853, %v1941
      %1943 = vmatmul.bf16.gmra.mxu0 %v861
      %v1944 = vpop.f32.mrf.mxu0
      %v1945 = vadd.f32 %v1856, %v1944
      %v1946 = vpop.f32.mrf.mxu0
      %v1947 = vadd.f32 %v1858, %v1946
      %1948 = vmatmul.bf16.gmra.mxu0 %v862
      %v1949 = vpop.f32.mrf.mxu0
      %v1950 = vadd.f32 %v1861, %v1949
      %v1951 = vpop.f32.mrf.mxu0
      %v1952 = vadd.f32 %v1863, %v1951
      %1953 = vmatmul.bf16.gmra.mxu0 %v863
      %v1954 = vpop.f32.mrf.mxu0
      %v1955 = vadd.f32 %v1866, %v1954
      %v1956 = vpop.f32.mrf.mxu0
      %v1957 = vadd.f32 %v1868, %v1956
      %1958 = vmatmul.bf16.gmra.mxu0 %v1010
      %v1959 = vpop.f32.mrf.mxu0
      %v1960 = vadd.f32 %v1871, %v1959
      %v1961 = vpop.f32.mrf.mxu0
      %v1962 = vadd.f32 %v1873, %v1961
      %1963 = vdwg.mxu0
      %1964 = vmatpush.bf16.msra.mxu0 %v1503
      %1965 = vmatpush.bf16.msra.mxu0 %v1502
      %1966 = vmatpush.bf16.msra.mxu0 %v1501
      %1967 = vmatpush.bf16.msra.mxu0 %v1500
      %1968 = vmatpush.bf16.msra.mxu0 %v1499
      %1969 = vmatpush.bf16.msra.mxu0 %v1498
      %1970 = vmatpush.bf16.msra.mxu0 %v1497
      %1971 = vmatpush.bf16.msra.mxu0 %v1496
      %1972 = vmatmul.bf16.gmra.mxu0 %v913
      %v1973 = vpop.f32.mrf.mxu0
      %v1974 = vadd.f32 %v1885, %v1973
      %v1975 = vpop.f32.mrf.mxu0
      %v1976 = vadd.f32 %v1887, %v1975
      %1977 = vmatmul.bf16.gmra.mxu0 %v914
      %v1978 = vpop.f32.mrf.mxu0
      %v1979 = vadd.f32 %v1890, %v1978
      %v1980 = vpop.f32.mrf.mxu0
      %v1981 = vadd.f32 %v1892, %v1980
      %1982 = vmatmul.bf16.gmra.mxu0 %v915
      %v1983 = vpop.f32.mrf.mxu0
      %v1984 = vadd.f32 %v1895, %v1983
      %v1985 = vpop.f32.mrf.mxu0
      %v1986 = vadd.f32 %v1897, %v1985
      %1987 = vmatmul.bf16.gmra.mxu0 %v916
      %v1988 = vpop.f32.mrf.mxu0
      %v1989 = vadd.f32 %v1900, %v1988
      %v1990 = vpop.f32.mrf.mxu0
      %v1991 = vadd.f32 %v1902, %v1990
      %1992 = vmatmul.bf16.gmra.mxu0 %v917
      %v1993 = vpop.f32.mrf.mxu0
      %v1994 = vadd.f32 %v1905, %v1993
      %v1995 = vpop.f32.mrf.mxu0
      %v1996 = vadd.f32 %v1907, %v1995
      %1997 = vmatmul.bf16.gmra.mxu0 %v918
      %v1998 = vpop.f32.mrf.mxu0
      %v1999 = vadd.f32 %v1910, %v1998
      %v2000 = vpop.f32.mrf.mxu0
      %v2001 = vadd.f32 %v1912, %v2000
      %2002 = vmatmul.bf16.gmra.mxu0 %v919
      %v2003 = vpop.f32.mrf.mxu0
      %v2004 = vadd.f32 %v1915, %v2003
      %v2005 = vpop.f32.mrf.mxu0
      %v2006 = vadd.f32 %v1917, %v2005
      %2007 = vmatmul.bf16.gmra.mxu0 %v920
      %v2008 = vpop.f32.mrf.mxu0
      %v2009 = vadd.f32 %v1920, %v2008
      %v2010 = vpop.f32.mrf.mxu0
      %v2011 = vadd.f32 %v1922, %v2010
      %2012 = vmatmul.bf16.gmra.mxu0 %v921
      %v2013 = vpop.f32.mrf.mxu0
      %v2014 = vadd.f32 %v1925, %v2013
      %v2015 = vpop.f32.mrf.mxu0
      %v2016 = vadd.f32 %v1927, %v2015
      %2017 = vmatmul.bf16.gmra.mxu0 %v922
      %v2018 = vpop.f32.mrf.mxu0
      %v2019 = vadd.f32 %v1930, %v2018
      %v2020 = vpop.f32.mrf.mxu0
      %v2021 = vadd.f32 %v1932, %v2020
      %2022 = vmatmul.bf16.gmra.mxu0 %v923
      %v2023 = vpop.f32.mrf.mxu0
      %v2024 = vadd.f32 %v1935, %v2023
      %v2025 = vpop.f32.mrf.mxu0
      %v2026 = vadd.f32 %v1937, %v2025
      %2027 = vmatmul.bf16.gmra.mxu0 %v924
      %v2028 = vpop.f32.mrf.mxu0
      %v2029 = vadd.f32 %v1940, %v2028
      %v2030 = vpop.f32.mrf.mxu0
      %v2031 = vadd.f32 %v1942, %v2030
      %2032 = vmatmul.bf16.gmra.mxu0 %v925
      %v2033 = vpop.f32.mrf.mxu0
      %v2034 = vadd.f32 %v1945, %v2033
      %v2035 = vpop.f32.mrf.mxu0
      %v2036 = vadd.f32 %v1947, %v2035
      %2037 = vmatmul.bf16.gmra.mxu0 %v926
      %v2038 = vpop.f32.mrf.mxu0
      %v2039 = vadd.f32 %v1950, %v2038
      %v2040 = vpop.f32.mrf.mxu0
      %v2041 = vadd.f32 %v1952, %v2040
      %2042 = vmatmul.bf16.gmra.mxu0 %v927
      %v2043 = vpop.f32.mrf.mxu0
      %v2044 = vadd.f32 %v1955, %v2043
      %v2045 = vpop.f32.mrf.mxu0
      %v2046 = vadd.f32 %v1957, %v2045
      %2047 = vmatmul.bf16.gmra.mxu0 %v1014
      %v2048 = vpop.f32.mrf.mxu0
      %v2049 = vadd.f32 %v1960, %v2048
      %v2050 = vpop.f32.mrf.mxu0
      %v2051 = vadd.f32 %v1962, %v2050
      %2052 = vdwg.mxu0
      %2053 = vmatpush.bf16.msra.mxu0 %v1511
      %2054 = vmatpush.bf16.msra.mxu0 %v1510
      %2055 = vmatpush.bf16.msra.mxu0 %v1509
      %2056 = vmatpush.bf16.msra.mxu0 %v1508
      %2057 = vmatpush.bf16.msra.mxu0 %v1507
      %2058 = vmatpush.bf16.msra.mxu0 %v1506
      %2059 = vmatpush.bf16.msra.mxu0 %v1505
      %2060 = vmatpush.bf16.msra.mxu0 %v1504
      %2061 = vmatmul.bf16.gmra.mxu0 %v977
      %v2062 = vpop.f32.mrf.mxu0
      %v2063 = vadd.f32 %v1974, %v2062
      %v2064 = vpop.f32.mrf.mxu0
      %v2065 = vadd.f32 %v1976, %v2064
      %2066 = vmatmul.bf16.gmra.mxu0 %v978
      %v2067 = vpop.f32.mrf.mxu0
      %v2068 = vadd.f32 %v1979, %v2067
      %v2069 = vpop.f32.mrf.mxu0
      %v2070 = vadd.f32 %v1981, %v2069
      %2071 = vmatmul.bf16.gmra.mxu0 %v979
      %v2072 = vpop.f32.mrf.mxu0
      %v2073 = vadd.f32 %v1984, %v2072
      %v2074 = vpop.f32.mrf.mxu0
      %v2075 = vadd.f32 %v1986, %v2074
      %2076 = vmatmul.bf16.gmra.mxu0 %v980
      %v2077 = vpop.f32.mrf.mxu0
      %v2078 = vadd.f32 %v1989, %v2077
      %v2079 = vpop.f32.mrf.mxu0
      %v2080 = vadd.f32 %v1991, %v2079
      %2081 = vmatmul.bf16.gmra.mxu0 %v981
      %v2082 = vpop.f32.mrf.mxu0
      %v2083 = vadd.f32 %v1994, %v2082
      %v2084 = vpop.f32.mrf.mxu0
      %v2085 = vadd.f32 %v1996, %v2084
      %2086 = vmatmul.bf16.gmra.mxu0 %v982
      %v2087 = vpop.f32.mrf.mxu0
      %v2088 = vadd.f32 %v1999, %v2087
      %v2089 = vpop.f32.mrf.mxu0
      %v2090 = vadd.f32 %v2001, %v2089
      %2091 = vmatmul.bf16.gmra.mxu0 %v983
      %v2092 = vpop.f32.mrf.mxu0
      %v2093 = vadd.f32 %v2004, %v2092
      %v2094 = vpop.f32.mrf.mxu0
      %v2095 = vadd.f32 %v2006, %v2094
      %2096 = vmatmul.bf16.gmra.mxu0 %v984
      %v2097 = vpop.f32.mrf.mxu0
      %v2098 = vadd.f32 %v2009, %v2097
      %v2099 = vpop.f32.mrf.mxu0
      %v2100 = vadd.f32 %v2011, %v2099
      %2101 = vmatmul.bf16.gmra.mxu0 %v985
      %v2102 = vpop.f32.mrf.mxu0
      %v2103 = vadd.f32 %v2014, %v2102
      %v2104 = vpop.f32.mrf.mxu0
      %v2105 = vadd.f32 %v2016, %v2104
      %2106 = vmatmul.bf16.gmra.mxu0 %v986
      %v2107 = vpop.f32.mrf.mxu0
      %v2108 = vadd.f32 %v2019, %v2107
      %v2109 = vpop.f32.mrf.mxu0
      %v2110 = vadd.f32 %v2021, %v2109
      %2111 = vmatmul.bf16.gmra.mxu0 %v987
      %v2112 = vpop.f32.mrf.mxu0
      %v2113 = vadd.f32 %v2024, %v2112
      %v2114 = vpop.f32.mrf.mxu0
      %v2115 = vadd.f32 %v2026, %v2114
      %2116 = vmatmul.bf16.gmra.mxu0 %v988
      %v2117 = vpop.f32.mrf.mxu0
      %v2118 = vadd.f32 %v2029, %v2117
      %v2119 = vpop.f32.mrf.mxu0
      %v2120 = vadd.f32 %v2031, %v2119
      %2121 = vmatmul.bf16.gmra.mxu0 %v989
      %v2122 = vpop.f32.mrf.mxu0
      %v2123 = vadd.f32 %v2034, %v2122
      %v2124 = vpop.f32.mrf.mxu0
      %v2125 = vadd.f32 %v2036, %v2124
      %2126 = vmatmul.bf16.gmra.mxu0 %v990
      %v2127 = vpop.f32.mrf.mxu0
      %v2128 = vadd.f32 %v2039, %v2127
      %v2129 = vpop.f32.mrf.mxu0
      %v2130 = vadd.f32 %v2041, %v2129
      %2131 = vmatmul.bf16.gmra.mxu0 %v991
      %v2132 = vpop.f32.mrf.mxu0
      %v2133 = vadd.f32 %v2044, %v2132
      %v2134 = vpop.f32.mrf.mxu0
      %v2135 = vadd.f32 %v2046, %v2134
      %2136 = vmatmul.bf16.gmra.mxu0 %v1018
      %v2137 = vpop.f32.mrf.mxu0
      %v2138 = vadd.f32 %v2049, %v2137
      %v2139 = vpop.f32.mrf.mxu0
      %v2140 = vadd.f32 %v2051, %v2139
      %2141 = vdwg.mxu0
      %2142 = vmatpush.bf16.msra.mxu0 %v1519
      %2143 = vmatpush.bf16.msra.mxu0 %v1518
      %2144 = vmatpush.bf16.msra.mxu0 %v1517
      %2145 = vmatpush.bf16.msra.mxu0 %v1516
      %2146 = vmatpush.bf16.msra.mxu0 %v1515
      %2147 = vmatpush.bf16.msra.mxu0 %v1514
      %2148 = vmatpush.bf16.msra.mxu0 %v1513
      %2149 = vmatpush.bf16.msra.mxu0 %v1512
      %2150 = vmatmul.bf16.gmra.mxu0 %v850
      %v2151 = vpop.f32.mrf.mxu0
      %v2152 = vadd.f32 %v2063, %v2151
      %v2153 = vpop.f32.mrf.mxu0
      %v2154 = vadd.f32 %v2065, %v2153
      %2155 = vmatmul.bf16.gmra.mxu0 %v851
      %v2156 = vpop.f32.mrf.mxu0
      %v2157 = vadd.f32 %v2068, %v2156
      %v2158 = vpop.f32.mrf.mxu0
      %v2159 = vadd.f32 %v2070, %v2158
      %2160 = vmatmul.bf16.gmra.mxu0 %v852
      %v2161 = vpop.f32.mrf.mxu0
      %v2162 = vadd.f32 %v2073, %v2161
      %v2163 = vpop.f32.mrf.mxu0
      %v2164 = vadd.f32 %v2075, %v2163
      %2165 = vmatmul.bf16.gmra.mxu0 %v853
      %v2166 = vpop.f32.mrf.mxu0
      %v2167 = vadd.f32 %v2078, %v2166
      %v2168 = vpop.f32.mrf.mxu0
      %v2169 = vadd.f32 %v2080, %v2168
      %2170 = vmatmul.bf16.gmra.mxu0 %v854
      %v2171 = vpop.f32.mrf.mxu0
      %v2172 = vadd.f32 %v2083, %v2171
      %v2173 = vpop.f32.mrf.mxu0
      %v2174 = vadd.f32 %v2085, %v2173
      %2175 = vmatmul.bf16.gmra.mxu0 %v855
      %v2176 = vpop.f32.mrf.mxu0
      %v2177 = vadd.f32 %v2088, %v2176
      %v2178 = vpop.f32.mrf.mxu0
      %v2179 = vadd.f32 %v2090, %v2178
      %2180 = vmatmul.bf16.gmra.mxu0 %v856
      %v2181 = vpop.f32.mrf.mxu0
      %v2182 = vadd.f32 %v2093, %v2181
      %v2183 = vpop.f32.mrf.mxu0
      %v2184 = vadd.f32 %v2095, %v2183
      %2185 = vmatmul.bf16.gmra.mxu0 %v857
      %v2186 = vpop.f32.mrf.mxu0
      %v2187 = vadd.f32 %v2098, %v2186
      %v2188 = vpop.f32.mrf.mxu0
      %v2189 = vadd.f32 %v2100, %v2188
      %2190 = vmatmul.bf16.gmra.mxu0 %v858
      %v2191 = vpop.f32.mrf.mxu0
      %v2192 = vadd.f32 %v2103, %v2191
      %v2193 = vpop.f32.mrf.mxu0
      %v2194 = vadd.f32 %v2105, %v2193
      %2195 = vmatmul.bf16.gmra.mxu0 %v859
      %v2196 = vpop.f32.mrf.mxu0
      %v2197 = vadd.f32 %v2108, %v2196
      %v2198 = vpop.f32.mrf.mxu0
      %v2199 = vadd.f32 %v2110, %v2198
      %2200 = vmatmul.bf16.gmra.mxu0 %v860
      %v2201 = vpop.f32.mrf.mxu0
      %v2202 = vadd.f32 %v2113, %v2201
      %v2203 = vpop.f32.mrf.mxu0
      %v2204 = vadd.f32 %v2115, %v2203
      %2205 = vmatmul.bf16.gmra.mxu0 %v861
      %v2206 = vpop.f32.mrf.mxu0
      %v2207 = vadd.f32 %v2118, %v2206
      %v2208 = vpop.f32.mrf.mxu0
      %v2209 = vadd.f32 %v2120, %v2208
      %2210 = vmatmul.bf16.gmra.mxu0 %v862
      %v2211 = vpop.f32.mrf.mxu0
      %v2212 = vadd.f32 %v2123, %v2211
      %v2213 = vpop.f32.mrf.mxu0
      %v2214 = vadd.f32 %v2125, %v2213
      %2215 = vmatmul.bf16.gmra.mxu0 %v863
      %v2216 = vpop.f32.mrf.mxu0
      %v2217 = vadd.f32 %v2128, %v2216
      %v2218 = vpop.f32.mrf.mxu0
      %v2219 = vadd.f32 %v2130, %v2218
      %2220 = vmatmul.bf16.gmra.mxu0 %v1010
      %v2221 = vpop.f32.mrf.mxu0
      %v2222 = vadd.f32 %v2133, %v2221
      %v2223 = vpop.f32.mrf.mxu0
      %v2224 = vadd.f32 %v2135, %v2223
      %2225 = vmatmul.bf16.gmra.mxu0 %v1022
      %v2226 = vpop.f32.mrf.mxu0
      %v2227 = vadd.f32 %v2138, %v2226
      %v2228 = vpop.f32.mrf.mxu0
      %v2229 = vadd.f32 %v2140, %v2228
      %2230 = vdwg.mxu0
      %2231 = vmatpush.bf16.msra.mxu0 %v1527
      %2232 = vmatpush.bf16.msra.mxu0 %v1526
      %2233 = vmatpush.bf16.msra.mxu0 %v1525
      %2234 = vmatpush.bf16.msra.mxu0 %v1524
      %2235 = vmatpush.bf16.msra.mxu0 %v1523
      %2236 = vmatpush.bf16.msra.mxu0 %v1522
      %2237 = vmatpush.bf16.msra.mxu0 %v1521
      %2238 = vmatpush.bf16.msra.mxu0 %v1520
      %2239 = vmatmul.bf16.gmra.mxu0 %v914
      %v2240 = vpop.f32.mrf.mxu0
      %v2241 = vadd.f32 %v2152, %v2240
      %v2242 = vpop.f32.mrf.mxu0
      %v2243 = vadd.f32 %v2154, %v2242
      %2244 = vmatmul.bf16.gmra.mxu0 %v915
      %v2245 = vpop.f32.mrf.mxu0
      %v2246 = vadd.f32 %v2157, %v2245
      %v2247 = vpop.f32.mrf.mxu0
      %v2248 = vadd.f32 %v2159, %v2247
      %2249 = vmatmul.bf16.gmra.mxu0 %v916
      %v2250 = vpop.f32.mrf.mxu0
      %v2251 = vadd.f32 %v2162, %v2250
      %v2252 = vpop.f32.mrf.mxu0
      %v2253 = vadd.f32 %v2164, %v2252
      %2254 = vmatmul.bf16.gmra.mxu0 %v917
      %v2255 = vpop.f32.mrf.mxu0
      %v2256 = vadd.f32 %v2167, %v2255
      %v2257 = vpop.f32.mrf.mxu0
      %v2258 = vadd.f32 %v2169, %v2257
      %2259 = vmatmul.bf16.gmra.mxu0 %v918
      %v2260 = vpop.f32.mrf.mxu0
      %v2261 = vadd.f32 %v2172, %v2260
      %v2262 = vpop.f32.mrf.mxu0
      %v2263 = vadd.f32 %v2174, %v2262
      %2264 = vmatmul.bf16.gmra.mxu0 %v919
      %v2265 = vpop.f32.mrf.mxu0
      %v2266 = vadd.f32 %v2177, %v2265
      %v2267 = vpop.f32.mrf.mxu0
      %v2268 = vadd.f32 %v2179, %v2267
      %2269 = vmatmul.bf16.gmra.mxu0 %v920
      %v2270 = vpop.f32.mrf.mxu0
      %v2271 = vadd.f32 %v2182, %v2270
      %v2272 = vpop.f32.mrf.mxu0
      %v2273 = vadd.f32 %v2184, %v2272
      %2274 = vmatmul.bf16.gmra.mxu0 %v921
      %v2275 = vpop.f32.mrf.mxu0
      %v2276 = vadd.f32 %v2187, %v2275
      %v2277 = vpop.f32.mrf.mxu0
      %v2278 = vadd.f32 %v2189, %v2277
      %2279 = vmatmul.bf16.gmra.mxu0 %v922
      %v2280 = vpop.f32.mrf.mxu0
      %v2281 = vadd.f32 %v2192, %v2280
      %v2282 = vpop.f32.mrf.mxu0
      %v2283 = vadd.f32 %v2194, %v2282
      %2284 = vmatmul.bf16.gmra.mxu0 %v923
      %v2285 = vpop.f32.mrf.mxu0
      %v2286 = vadd.f32 %v2197, %v2285
      %v2287 = vpop.f32.mrf.mxu0
      %v2288 = vadd.f32 %v2199, %v2287
      %2289 = vmatmul.bf16.gmra.mxu0 %v924
      %v2290 = vpop.f32.mrf.mxu0
      %v2291 = vadd.f32 %v2202, %v2290
      %v2292 = vpop.f32.mrf.mxu0
      %v2293 = vadd.f32 %v2204, %v2292
      %2294 = vmatmul.bf16.gmra.mxu0 %v925
      %v2295 = vpop.f32.mrf.mxu0
      %v2296 = vadd.f32 %v2207, %v2295
      %v2297 = vpop.f32.mrf.mxu0
      %v2298 = vadd.f32 %v2209, %v2297
      %2299 = vmatmul.bf16.gmra.mxu0 %v926
      %v2300 = vpop.f32.mrf.mxu0
      %v2301 = vadd.f32 %v2212, %v2300
      %v2302 = vpop.f32.mrf.mxu0
      %v2303 = vadd.f32 %v2214, %v2302
      %2304 = vmatmul.bf16.gmra.mxu0 %v927
      %v2305 = vpop.f32.mrf.mxu0
      %v2306 = vadd.f32 %v2217, %v2305
      %v2307 = vpop.f32.mrf.mxu0
      %v2308 = vadd.f32 %v2219, %v2307
      %2309 = vmatmul.bf16.gmra.mxu0 %v1014
      %v2310 = vpop.f32.mrf.mxu0
      %v2311 = vadd.f32 %v2222, %v2310
      %v2312 = vpop.f32.mrf.mxu0
      %v2313 = vadd.f32 %v2224, %v2312
      %2314 = vmatmul.bf16.gmra.mxu0 %v1026
      %v2315 = vpop.f32.mrf.mxu0
      %v2316 = vadd.f32 %v2227, %v2315
      %v2317 = vpop.f32.mrf.mxu0
      %v2318 = vadd.f32 %v2229, %v2317
      %2319 = vdwg.mxu0
      %2320 = vmatpush.bf16.msra.mxu0 %v1535
      %2321 = vmatpush.bf16.msra.mxu0 %v1534
      %2322 = vmatpush.bf16.msra.mxu0 %v1533
      %2323 = vmatpush.bf16.msra.mxu0 %v1532
      %2324 = vmatpush.bf16.msra.mxu0 %v1531
      %2325 = vmatpush.bf16.msra.mxu0 %v1530
      %2326 = vmatpush.bf16.msra.mxu0 %v1529
      %2327 = vmatpush.bf16.msra.mxu0 %v1528
      %2328 = vmatmul.bf16.gmra.mxu0 %v978
      %v2329 = vpop.f32.mrf.mxu0
      %v2330 = vadd.f32 %v2241, %v2329
      %v2331 = vpop.f32.mrf.mxu0
      %v2332 = vadd.f32 %v2243, %v2331
      %2333 = vmatmul.bf16.gmra.mxu0 %v979
      %v2334 = vpop.f32.mrf.mxu0
      %v2335 = vadd.f32 %v2246, %v2334
      %v2336 = vpop.f32.mrf.mxu0
      %v2337 = vadd.f32 %v2248, %v2336
      %2338 = vmatmul.bf16.gmra.mxu0 %v980
      %v2339 = vpop.f32.mrf.mxu0
      %v2340 = vadd.f32 %v2251, %v2339
      %v2341 = vpop.f32.mrf.mxu0
      %v2342 = vadd.f32 %v2253, %v2341
      %2343 = vmatmul.bf16.gmra.mxu0 %v981
      %v2344 = vpop.f32.mrf.mxu0
      %v2345 = vadd.f32 %v2256, %v2344
      %v2346 = vpop.f32.mrf.mxu0
      %v2347 = vadd.f32 %v2258, %v2346
      %2348 = vmatmul.bf16.gmra.mxu0 %v982
      %v2349 = vpop.f32.mrf.mxu0
      %v2350 = vadd.f32 %v2261, %v2349
      %v2351 = vpop.f32.mrf.mxu0
      %v2352 = vadd.f32 %v2263, %v2351
      %2353 = vmatmul.bf16.gmra.mxu0 %v983
      %v2354 = vpop.f32.mrf.mxu0
      %v2355 = vadd.f32 %v2266, %v2354
      %v2356 = vpop.f32.mrf.mxu0
      %v2357 = vadd.f32 %v2268, %v2356
      %2358 = vmatmul.bf16.gmra.mxu0 %v984
      %v2359 = vpop.f32.mrf.mxu0
      %v2360 = vadd.f32 %v2271, %v2359
      %v2361 = vpop.f32.mrf.mxu0
      %v2362 = vadd.f32 %v2273, %v2361
      %2363 = vmatmul.bf16.gmra.mxu0 %v985
      %v2364 = vpop.f32.mrf.mxu0
      %v2365 = vadd.f32 %v2276, %v2364
      %v2366 = vpop.f32.mrf.mxu0
      %v2367 = vadd.f32 %v2278, %v2366
      %2368 = vmatmul.bf16.gmra.mxu0 %v986
      %v2369 = vpop.f32.mrf.mxu0
      %v2370 = vadd.f32 %v2281, %v2369
      %v2371 = vpop.f32.mrf.mxu0
      %v2372 = vadd.f32 %v2283, %v2371
      %2373 = vmatmul.bf16.gmra.mxu0 %v987
      %v2374 = vpop.f32.mrf.mxu0
      %v2375 = vadd.f32 %v2286, %v2374
      %v2376 = vpop.f32.mrf.mxu0
      %v2377 = vadd.f32 %v2288, %v2376
      %2378 = vmatmul.bf16.gmra.mxu0 %v988
      %v2379 = vpop.f32.mrf.mxu0
      %v2380 = vadd.f32 %v2291, %v2379
      %v2381 = vpop.f32.mrf.mxu0
      %v2382 = vadd.f32 %v2293, %v2381
      %2383 = vmatmul.bf16.gmra.mxu0 %v989
      %v2384 = vpop.f32.mrf.mxu0
      %v2385 = vadd.f32 %v2296, %v2384
      %v2386 = vpop.f32.mrf.mxu0
      %v2387 = vadd.f32 %v2298, %v2386
      %2388 = vmatmul.bf16.gmra.mxu0 %v990
      %v2389 = vpop.f32.mrf.mxu0
      %v2390 = vadd.f32 %v2301, %v2389
      %v2391 = vpop.f32.mrf.mxu0
      %v2392 = vadd.f32 %v2303, %v2391
      %2393 = vmatmul.bf16.gmra.mxu0 %v991
      %v2394 = vpop.f32.mrf.mxu0
      %v2395 = vadd.f32 %v2306, %v2394
      %v2396 = vpop.f32.mrf.mxu0
      %v2397 = vadd.f32 %v2308, %v2396
      %2398 = vmatmul.bf16.gmra.mxu0 %v1018
      %v2399 = vpop.f32.mrf.mxu0
      %v2400 = vadd.f32 %v2311, %v2399
      %v2401 = vpop.f32.mrf.mxu0
      %v2402 = vadd.f32 %v2313, %v2401
      %2403 = vmatmul.bf16.gmra.mxu0 %v1030
      %v2404 = vpop.f32.mrf.mxu0
      %v2405 = vadd.f32 %v2316, %v2404
      %v2406 = vpop.f32.mrf.mxu0
      %v2407 = vadd.f32 %v2318, %v2406
      %2408 = vdwg.mxu0
      %vm2409 = vcmask 31744
      %2410 = vst.msk [vmem:[%s143] sm:$0xff] %vm2409, %v2330
      %2411 = vst.msk [vmem:[%s143 + $0x8] sm:$0xff] %vm2409, %v2332
      %2412 = vst.msk [vmem:[%s143 + $0x10] sm:$0xff] %vm2409, %v2335
      %2413 = vst.msk [vmem:[%s143 + $0x18] sm:$0xff] %vm2409, %v2337
      %2414 = vst.msk [vmem:[%s143 + $0x20] sm:$0xff] %vm2409, %v2340
      %2415 = vst.msk [vmem:[%s143 + $0x28] sm:$0xff] %vm2409, %v2342
      %2416 = vst.msk [vmem:[%s143 + $0x30] sm:$0xff] %vm2409, %v2345
      %2417 = vst.msk [vmem:[%s143 + $0x38] sm:$0xff] %vm2409, %v2347
      %2418 = vst.msk [vmem:[%s143 + $0x40] sm:$0xff] %vm2409, %v2350
      %2419 = vst.msk [vmem:[%s143 + $0x48] sm:$0xff] %vm2409, %v2352
      %2420 = vst.msk [vmem:[%s143 + $0x50] sm:$0xff] %vm2409, %v2355
      %2421 = vst.msk [vmem:[%s143 + $0x58] sm:$0xff] %vm2409, %v2357
      %2422 = vst.msk [vmem:[%s143 + $0x60] sm:$0xff] %vm2409, %v2360
      %2423 = vst.msk [vmem:[%s143 + $0x68] sm:$0xff] %vm2409, %v2362
      %2424 = vst.msk [vmem:[%s143 + $0x70] sm:$0xff] %vm2409, %v2365
      %2425 = vst.msk [vmem:[%s143 + $0x78] sm:$0xff] %vm2409, %v2367
      %2426 = vst.msk [vmem:[%s143 + $0x80] sm:$0xff] %vm2409, %v2370
      %2427 = vst.msk [vmem:[%s143 + $0x88] sm:$0xff] %vm2409, %v2372
      %2428 = vst.msk [vmem:[%s143 + $0x90] sm:$0xff] %vm2409, %v2375
      %2429 = vst.msk [vmem:[%s143 + $0x98] sm:$0xff] %vm2409, %v2377
      %2430 = vst.msk [vmem:[%s143 + $0xa0] sm:$0xff] %vm2409, %v2380
      %2431 = vst.msk [vmem:[%s143 + $0xa8] sm:$0xff] %vm2409, %v2382
      %2432 = vst.msk [vmem:[%s143 + $0xb0] sm:$0xff] %vm2409, %v2385
      %2433 = vst.msk [vmem:[%s143 + $0xb8] sm:$0xff] %vm2409, %v2387
      %2434 = vst.msk [vmem:[%s143 + $0xc0] sm:$0xff] %vm2409, %v2390
      %2435 = vst.msk [vmem:[%s143 + $0xc8] sm:$0xff] %vm2409, %v2392
      %2436 = vst.msk [vmem:[%s143 + $0xd0] sm:$0xff] %vm2409, %v2395
      %2437 = vst.msk [vmem:[%s143 + $0xd8] sm:$0xff] %vm2409, %v2397
      %2438 = vst.msk [vmem:[%s143 + $0xe0] sm:$0xff] %vm2409, %v2400
      %2439 = vst.msk [vmem:[%s143 + $0xe8] sm:$0xff] %vm2409, %v2402
      %2440 = vst.msk [vmem:[%s143 + $0xf0] sm:$0xff] %vm2409, %v2405
      %2441 = vst.msk [vmem:[%s143 + $0xf8] sm:$0xff] %vm2409, %v2407
      %p2442 = scmp.lt.s32.totalorder %s13, 1
      %s2443 = scalar_select %p2442, %s13, 1
      %s2444 = smul.addr %s2443, 32
      %s2445 = smul.addr %s2444, 8
      %s2446 = scalar_lea.vmem %s2, %s2445
      // Predicated region
      $region29: #{_lambda_.7} parent=27 // pred_check
        %p2447 = pneg %p78
      $region30: #{_lambda_.7} parent=27 // pred_check_branch
        %2449 = sbr.rel (%p2447) target = $region32
      $region31: #{_lambda_.7} parent=27 // pred_region
        _
      $region32: #{_lambda_.7} parent=27 // pred_fallthru
        _
    $region28: #{_lambda_.7} parent=5 // pred_fallthru
      _
    %p2450 = scmp.le.s32.totalorder 2, %s8
    // Predicated region
    $region33: #{_lambda_.7} parent=5 // pred_check
      %p2451 = pneg %p2450
    $region34: #{_lambda_.7} parent=5 // pred_check_branch
      %2453 = sbr.rel (%p2451) target = $region36
    $region35: #{_lambda_.7} parent=5 // pred_region
      %s2454 = ssub.s32 %s8, 2
      // Predicated region
      $region37: #{_lambda_.7} parent=35 // pred_check
        %p2455 = pneg %p84
      $region38: #{_lambda_.7} parent=35 // pred_check_branch
        %2457 = sbr.rel (%p2455) target = $region40
      $region39: #{_lambda_.7} parent=35 // pred_region
        %p2458 = scmp.lt.s32.totalorder %s14, 1
        %s2459 = scalar_select %p2458, %s14, 1
        %s2460 = smul.addr %s2459, 32
        %s2461 = smul.addr %s2460, 8
        %s2462 = scalar_lea.vmem %s2, %s2461
      $region40: #{_lambda_.7} parent=35 // pred_fallthru
        _
    $region36: #{_lambda_.7} parent=5 // pred_fallthru
      _
  $region6: #{_lambda_.7} parent=0 // loop_footer
    %s12 = sadd.s32 1, %s8
  $region7: #{_lambda_.7} parent=0 // loop_footer_branch
    %7 = sbr.rel target = $region3
  $region8: #{_lambda_.7} parent=0 // loop_exit
    _

</llo_original>
